<compile_context>
chip_gen: v6e
topology: v6e:2x2x1
jax: 0.10.0
libtpu: 0.0.40
codegen_flags: <defaults>
</compile_context>

<pallas_src>
import functools

import jax
import jax.numpy as jnp
from jax import lax
from jax.experimental import pallas as pl
from jax.experimental.pallas import tpu as pltpu


# ----------------------------------------------------------------------------
# Fused kernel: bulk input projection + bidirectional recurrence + head
# ----------------------------------------------------------------------------
def bigru_fused_kernel(xcat_ref, wih_ref, whh_ref, bi_ref, bhn_ref,
                       wfc_ref, bfc_ref,
                       logprobs_ref, hN_ref,
                       gi_ref, h_ref, feat_f_ref, feat_b_ref):
    T, B, I2 = xcat_ref.shape          # I2 = 2*input_size  (x | x reversed in time)
    H2 = h_ref.shape[1]                # H2 = 2*hidden      ([h_f | h_b])
    H = H2 // 2

    # ---- Stage 1: bulk input projections for BOTH directions, one wide MXU matmul ----
    # bi_ref already holds b_ih for all gates plus b_hh for the r and z gates (pre-summed).
    x2d = xcat_ref[...].reshape(T * B, I2)
    gi_ref[...] = (jnp.dot(x2d, wih_ref[...], preferred_element_type=jnp.float32)
                   + bi_ref[...]).reshape(T, B, 3 * H2)

    # ---- Stage 2: serial recurrence (one block-diagonal matmul per step, both directions) ----
    h_ref[...] = jnp.zeros_like(h_ref)

    # Hoist weight/bias loads out of the loop.
    whh = whh_ref[...]                 # (2H, 6H), block-diagonal, cols [r_f r_b z_f z_b n_f n_b]
    bhn = bhn_ref[...]                 # (1, 2H)  = [b_hh_n_f | b_hh_n_b]

    def body(t, carry):
        gi = gi_ref[t]                                      # (B, 6H)
        h_prev = h_ref[...]                                 # (B, 2H) = [h_f | h_b]
        gh = jnp.dot(h_prev, whh, preferred_element_type=jnp.float32)   # (B, 6H)

        r = jax.nn.sigmoid(gi[:, 0:H2] + gh[:, 0:H2])                    # (B, 2H)
        z = jax.nn.sigmoid(gi[:, H2:2 * H2] + gh[:, H2:2 * H2])          # (B, 2H)
        n = jnp.tanh(gi[:, 2 * H2:] + r * (gh[:, 2 * H2:] + bhn))        # (B, 2H)
        h_new = n + z * (h_prev - n)                         # == (1 - z) * n + z * h_prev
        h_ref[...] = h_new

        # out[t, -1, :H]  (forward hidden at time t)
        feat_f_ref[pl.ds(t, 1), :] = h_new[B - 1:B, 0:H]
        # out[T-1-t, -1, H:]  (backward hidden for input time T-1-t)
        feat_b_ref[pl.ds(T - 1 - t, 1), :] = h_new[B - 1:B, H:H2]
        return carry

    lax.fori_loop(0, T, body, 0, unroll=True)

    hN_ref[0] = h_ref[:, 0:H]          # forward final hidden
    hN_ref[1] = h_ref[:, H:H2]         # backward final hidden

    # ---- Stage 3: fused head = LogSoftmax(fc(relu(out[:, -1]))) ----
    feat = jnp.concatenate([feat_f_ref[...], feat_b_ref[...]], axis=-1)  # (T, 2H)
    xr = jnp.maximum(feat, 0.0)                                          # ReLU
    logits = jnp.dot(xr, wfc_ref[...], preferred_element_type=jnp.float32) + bfc_ref[...]
    m = jnp.max(logits, axis=-1, keepdims=True)                          # stable log-softmax
    s = logits - m
    lse = jnp.log(jnp.sum(jnp.exp(s), axis=-1, keepdims=True))
    logprobs_ref[...] = s - lse


# ----------------------------------------------------------------------------
# Wrapper: fuse PyTorch-layout params into the block-diagonal kernel layout
# ----------------------------------------------------------------------------
def _fuse_bidirectional(params, H, I):
    """Build interleaved block-diagonal weights for both directions.

    Column layout (width 6H): [r_f | r_b | z_f | z_b | n_f | n_b]
    Row layout:  W_ih_c rows = [x | x_reversed] (2I),  W_hh_c rows = [h_f | h_b] (2H).
    """
    f32 = jnp.float32

    def gates(w):              # (3H, X) -> r, z, n each (H, X)
        return w[:H], w[H:2 * H], w[2 * H:]

    # --- input-hidden weights -> (2I, 6H), block diagonal ---
    wrf, wzf, wnf = gates(params["w_ih_f"])          # (H, I)
    wrb, wzb, wnb = gates(params["w_ih_b"])
    Zi = jnp.zeros((H, I), f32)
    w_ih_c = jnp.concatenate([
        jnp.concatenate([wrf, Zi], axis=1),          # r_f   (uses x part only)
        jnp.concatenate([Zi, wrb], axis=1),          # r_b   (uses reversed-x part only)
        jnp.concatenate([wzf, Zi], axis=1),          # z_f
        jnp.concatenate([Zi, wzb], axis=1),          # z_b
        jnp.concatenate([wnf, Zi], axis=1),          # n_f
        jnp.concatenate([Zi, wnb], axis=1),          # n_b
    ], axis=0).T                                     # (2I, 6H)

    # --- hidden-hidden weights -> (2H, 6H), block diagonal ---
    hrf, hzf, hnf = gates(params["w_hh_f"])          # (H, H)
    hrb, hzb, hnb = gates(params["w_hh_b"])
    Zh = jnp.zeros((H, H), f32)
    w_hh_c = jnp.concatenate([
        jnp.concatenate([hrf, Zh], axis=1),
        jnp.concatenate([Zh, hrb], axis=1),
        jnp.concatenate([hzf, Zh], axis=1),
        jnp.concatenate([Zh, hzb], axis=1),
        jnp.concatenate([hnf, Zh], axis=1),
        jnp.concatenate([Zh, hnb], axis=1),
    ], axis=0).T                                     # (2H, 6H)

    # --- biases ---
    brf_i, bzf_i, bnf_i = gates(params["b_ih_f"])
    brf_h, bzf_h, bnf_h = gates(params["b_hh_f"])
    brb_i, bzb_i, bnb_i = gates(params["b_ih_b"])
    brb_h, bzb_h, bnb_h = gates(params["b_hh_b"])
    b_i_c = jnp.concatenate([brf_i + brf_h, brb_i + brb_h,     # r: pre-summed
                             bzf_i + bzf_h, bzb_i + bzb_h,     # z: pre-summed
                             bnf_i, bnb_i])[None, :]           # n: input bias only -> (1, 6H)
    b_hn_c = jnp.concatenate([bnf_h, bnb_h])[None, :]          # (1, 2H), stays inside r*(...)
    return w_ih_c, w_hh_c, b_i_c, b_hn_c


def bi_gru_forward(x, params, hidden_size, output_size):
    T, B, I = x.shape
    H = hidden_size

    # Absorb the backward direction's time reversal into the input (layout plumbing, done once).
    x_cat = jnp.concatenate([x, x[::-1]], axis=-1)                       # (T, B, 2I)

    w_ih_c, w_hh_c, b_i_c, b_hn_c = _fuse_bidirectional(params, H, I)
    w_fc = params["w_fc"].T                                              # (2H, O)
    b_fc = params["b_fc"][None, :]                                       # (1, O)

    vmem = pl.BlockSpec(memory_space=pltpu.MemorySpace.VMEM)

    logprobs, h_n = pl.pallas_call(
        bigru_fused_kernel,
        out_shape=(
            jax.ShapeDtypeStruct((T, output_size), jnp.float32),         # log-probs
            jax.ShapeDtypeStruct((2, B, H), jnp.float32),                # h_n
        ),
        in_specs=[vmem] * 7,
        out_specs=(vmem, vmem),
        scratch_shapes=[
            pltpu.VMEM((T, B, 6 * H), jnp.float32),   # gi (precomputed input projections, both dirs)
            pltpu.VMEM((B, 2 * H), jnp.float32),      # h  = [h_f | h_b]
            pltpu.VMEM((T, H), jnp.float32),          # feat_f (out[:, -1, :H])
            pltpu.VMEM((T, H), jnp.float32),          # feat_b (out[:, -1, H:])
        ],
    )(x_cat, w_ih_c, w_hh_c, b_i_c, b_hn_c, w_fc, b_fc)

    return logprobs, h_n


def init_params(key, input_size, hidden_size, output_size):
    """PyTorch-style parameter layout (weight_ih_l0 etc.), gates ordered r|z|n."""
    H = hidden_size
    k_gru = 1.0 / jnp.sqrt(jnp.float32(H))
    k_fc = 1.0 / jnp.sqrt(jnp.float32(2 * H))
    keys = jax.random.split(key, 10)

    def u(k_, shape, bound):
        return jax.random.uniform(k_, shape, jnp.float32, -bound, bound)

    return {
        "w_ih_f": u(keys[0], (3 * H, input_size), k_gru),
        "w_hh_f": u(keys[1], (3 * H, H), k_gru),
        "b_ih_f": u(keys[2], (3 * H,), k_gru),
        "b_hh_f": u(keys[3], (3 * H,), k_gru),
        "w_ih_b": u(keys[4], (3 * H, input_size), k_gru),
        "w_hh_b": u(keys[5], (3 * H, H), k_gru),
        "b_ih_b": u(keys[6], (3 * H,), k_gru),
        "b_hh_b": u(keys[7], (3 * H,), k_gru),
        "w_fc": u(keys[8], (output_size, 2 * H), k_fc),
        "b_fc": u(keys[9], (output_size,), k_fc),
    }


# ----------------------------------------------------------------------------
# Pure-JAX reference (canonical PyTorch GRU equations) for a correctness check
# ----------------------------------------------------------------------------
def reference_forward(x, params, hidden_size, output_size):
    T, B, I = x.shape
    H = hidden_size

    def gru_dir(xs, w_ih, w_hh, b_ih, b_hh):
        def step(h, x_t):
            gi = x_t @ w_ih.T + b_ih
            gh = h @ w_hh.T + b_hh
            r = jax.nn.sigmoid(gi[:, :H] + gh[:, :H])
            z = jax.nn.sigmoid(gi[:, H:2 * H] + gh[:, H:2 * H])
            n = jnp.tanh(gi[:, 2 * H:] + r * gh[:, 2 * H:])
            h_new = (1.0 - z) * n + z * h
            return h_new, h_new

        h0 = jnp.zeros((B, H), jnp.float32)
        h_last, outs = lax.scan(step, h0, xs)
        return h_last, outs

    hf, out_f = gru_dir(x, params["w_ih_f"], params["w_hh_f"], params["b_ih_f"], params["b_hh_f"])
    hb, out_b_rev = gru_dir(x[::-1], params["w_ih_b"], params["w_hh_b"], params["b_ih_b"], params["b_hh_b"])
    out_b = out_b_rev[::-1]
    out = jnp.concatenate([out_f, out_b], axis=-1)          # (T, B, 2H)
    h_n = jnp.stack([hf, hb], axis=0)                       # (2, B, H)

    out_last = out[:, -1, :]                                # last BATCH element, per the PyTorch code
    logits = jnp.maximum(out_last, 0.0) @ params["w_fc"].T + params["b_fc"]
    logprobs = jax.nn.log_softmax(logits, axis=1)
    return logprobs, h_n


if __name__ == "__main__":
    SEQ, BATCH, INPUT, HIDDEN, OUTPUT = 8, 2, 16, 32, 10

    key = jax.random.PRNGKey(0)
    k_param, k_x = jax.random.split(key)
    params = init_params(k_param, INPUT, HIDDEN, OUTPUT)
    x = jax.random.normal(k_x, (SEQ, BATCH, INPUT), jnp.float32)

    fwd = jax.jit(functools.partial(bi_gru_forward, hidden_size=HIDDEN, output_size=OUTPUT))
    logprobs, h_n = fwd(x, params)
    jax.block_until_ready((logprobs, h_n))

    ref_logprobs, ref_h_n = reference_forward(x, params, HIDDEN, OUTPUT)
    assert logprobs.shape == (SEQ, OUTPUT)
    assert h_n.shape == (2, BATCH, HIDDEN)
    assert jnp.allclose(logprobs, ref_logprobs, atol=1e-3, rtol=1e-3)
    assert jnp.allclose(h_n, ref_h_n, atol=1e-3, rtol=1e-3)

    print("KERNEL_OK")
</pallas_src>

<mosaic_0001>
module attributes {stable_mosaic.version = 11 : i64} {
  func.func @bigru_fused_kernel(%arg0: memref<8x2x32xf32, #tpu.memory_space<vmem>>, %arg1: memref<32x192xf32, #tpu.memory_space<vmem>>, %arg2: memref<64x192xf32, #tpu.memory_space<vmem>>, %arg3: memref<1x192xf32, #tpu.memory_space<vmem>>, %arg4: memref<1x64xf32, #tpu.memory_space<vmem>>, %arg5: memref<64x10xf32, #tpu.memory_space<vmem>>, %arg6: memref<1x10xf32, #tpu.memory_space<vmem>>, %arg7: memref<8x10xf32, #tpu.memory_space<vmem>>, %arg8: memref<2x2x32xf32, #tpu.memory_space<vmem>>, %arg9: memref<8x2x192xf32, #tpu.memory_space<vmem>>, %arg10: memref<2x64xf32, #tpu.memory_space<vmem>>, %arg11: memref<8x32xf32, #tpu.memory_space<vmem>>, %arg12: memref<8x32xf32, #tpu.memory_space<vmem>>) attributes {dimension_semantics = [], scalar_prefetch = 0 : i64, scratch_operands = 4 : i64, tpu.core_type = #tpu.core_type<tc>} {
    %c0 = arith.constant 0 : index
    %c0_0 = arith.constant 0 : index
    %c0_1 = arith.constant 0 : index
    %0 = vector.load %arg0[%c0, %c0_0, %c0_1] : memref<8x2x32xf32, #tpu.memory_space<vmem>>, vector<8x2x32xf32>
    %1 = vector.shape_cast %0 : vector<8x2x32xf32> to vector<16x32xf32>
    %c0_2 = arith.constant 0 : index
    %c0_3 = arith.constant 0 : index
    %2 = vector.load %arg1[%c0_2, %c0_3] : memref<32x192xf32, #tpu.memory_space<vmem>>, vector<32x192xf32>
    %cst = arith.constant dense<0.000000e+00> : vector<16x192xf32>
    %3 = tpu.matmul %1, %2, %cst {dimension_numbers = #tpu.dot_dimension_numbers<[1], [0], [0], [1], [0, 0, 1, 1], [], []>} : vector<16x32xf32>, vector<32x192xf32>, vector<16x192xf32> -> vector<16x192xf32>
    %c0_4 = arith.constant 0 : index
    %c0_5 = arith.constant 0 : index
    %4 = vector.load %arg3[%c0_4, %c0_5] : memref<1x192xf32, #tpu.memory_space<vmem>>, vector<1x192xf32>
    %5 = vector.broadcast %4 : vector<1x192xf32> to vector<16x192xf32>
    %6 = arith.addf %3, %5 : vector<16x192xf32>
    %7 = vector.shape_cast %6 : vector<16x192xf32> to vector<8x2x192xf32>
    %c0_6 = arith.constant 0 : index
    %c0_7 = arith.constant 0 : index
    %c0_8 = arith.constant 0 : index
    %8 = vector.load %arg9[%c0_6, %c0_7, %c0_8] : memref<8x2x192xf32, #tpu.memory_space<vmem>>, vector<8x2x192xf32>
    tpu.vector_store %arg9[%c0_6, %c0_7, %c0_8], %7 {strides = array<i32>} : memref<8x2x192xf32, #tpu.memory_space<vmem>>, vector<8x2x192xf32>,
    %cst_9 = arith.constant 0.000000e+00 : f32
    %9 = vector.broadcast %cst_9 : f32 to vector<2x64xf32>
    %c0_10 = arith.constant 0 : index
    %c0_11 = arith.constant 0 : index
    %10 = vector.load %arg10[%c0_10, %c0_11] : memref<2x64xf32, #tpu.memory_space<vmem>>, vector<2x64xf32>
    tpu.vector_store %arg10[%c0_10, %c0_11], %9 {strides = array<i32>} : memref<2x64xf32, #tpu.memory_space<vmem>>, vector<2x64xf32>,
    %c0_12 = arith.constant 0 : index
    %c0_13 = arith.constant 0 : index
    %11 = vector.load %arg2[%c0_12, %c0_13] : memref<64x192xf32, #tpu.memory_space<vmem>>, vector<64x192xf32>
    %c0_14 = arith.constant 0 : index
    %c0_15 = arith.constant 0 : index
    %12 = vector.load %arg4[%c0_14, %c0_15] : memref<1x64xf32, #tpu.memory_space<vmem>>, vector<1x64xf32>
    %c0_i32 = arith.constant 0 : i32
    %13 = arith.index_cast %c0_i32 : i32 to index
    %c0_16 = arith.constant 0 : index
    %c0_17 = arith.constant 0 : index
    %14 = vector.load %arg9[%13, %c0_16, %c0_17] : memref<8x2x192xf32, #tpu.memory_space<vmem>>, vector<1x2x192xf32>
    %15 = vector.shape_cast %14 : vector<1x2x192xf32> to vector<2x192xf32>
    %c0_18 = arith.constant 0 : index
    %c0_19 = arith.constant 0 : index
    %16 = vector.load %arg10[%c0_18, %c0_19] : memref<2x64xf32, #tpu.memory_space<vmem>>, vector<2x64xf32>
    %cst_20 = arith.constant dense<0.000000e+00> : vector<2x192xf32>
    %17 = tpu.matmul %16, %11, %cst_20 {dimension_numbers = #tpu.dot_dimension_numbers<[1], [0], [0], [1], [0, 0, 1, 1], [], []>} : vector<2x64xf32>, vector<64x192xf32>, vector<2x192xf32> -> vector<2x192xf32>
    %18 = vector.extract_strided_slice %15 {offsets = [0, 0], sizes = [2, 64], strides = [1, 1]} : vector<2x192xf32> to vector<2x64xf32>
    %19 = vector.extract_strided_slice %17 {offsets = [0, 0], sizes = [2, 64], strides = [1, 1]} : vector<2x192xf32> to vector<2x64xf32>
    %20 = arith.addf %18, %19 : vector<2x64xf32>
    %21 = arith.negf %20 : vector<2x64xf32>
    %22 = math.exp %21 : vector<2x64xf32>
    %cst_21 = arith.constant 1.000000e+00 : f32
    %23 = vector.broadcast %cst_21 : f32 to vector<2x64xf32>
    %24 = arith.addf %23, %22 : vector<2x64xf32>
    %25 = arith.divf %23, %24 : vector<2x64xf32>
    %26 = vector.extract_strided_slice %15 {offsets = [0, 64], sizes = [2, 64], strides = [1, 1]} : vector<2x192xf32> to vector<2x64xf32>
    %27 = vector.extract_strided_slice %17 {offsets = [0, 64], sizes = [2, 64], strides = [1, 1]} : vector<2x192xf32> to vector<2x64xf32>
    %28 = arith.addf %26, %27 : vector<2x64xf32>
    %29 = arith.negf %28 : vector<2x64xf32>
    %30 = math.exp %29 : vector<2x64xf32>
    %cst_22 = arith.constant 1.000000e+00 : f32
    %31 = vector.broadcast %cst_22 : f32 to vector<2x64xf32>
    %32 = arith.addf %31, %30 : vector<2x64xf32>
    %33 = arith.divf %31, %32 : vector<2x64xf32>
    %34 = vector.extract_strided_slice %15 {offsets = [0, 128], sizes = [2, 64], strides = [1, 1]} : vector<2x192xf32> to vector<2x64xf32>
    %35 = vector.extract_strided_slice %17 {offsets = [0, 128], sizes = [2, 64], strides = [1, 1]} : vector<2x192xf32> to vector<2x64xf32>
    %36 = vector.broadcast %12 : vector<1x64xf32> to vector<2x64xf32>
    %37 = arith.addf %35, %36 : vector<2x64xf32>
    %38 = arith.mulf %25, %37 : vector<2x64xf32>
    %39 = arith.addf %34, %38 : vector<2x64xf32>
    %40 = math.tanh %39 : vector<2x64xf32>
    %41 = arith.subf %16, %40 : vector<2x64xf32>
    %42 = arith.mulf %33, %41 : vector<2x64xf32>
    %43 = arith.addf %40, %42 : vector<2x64xf32>
    %c0_23 = arith.constant 0 : index
    %c0_24 = arith.constant 0 : index
    %44 = vector.load %arg10[%c0_23, %c0_24] : memref<2x64xf32, #tpu.memory_space<vmem>>, vector<2x64xf32>
    tpu.vector_store %arg10[%c0_23, %c0_24], %43 {strides = array<i32>} : memref<2x64xf32, #tpu.memory_space<vmem>>, vector<2x64xf32>,
    %45 = vector.extract_strided_slice %43 {offsets = [1, 0], sizes = [1, 32], strides = [1, 1]} : vector<2x64xf32> to vector<1x32xf32>
    %46 = arith.index_cast %c0_i32 : i32 to index
    %c0_25 = arith.constant 0 : index
    %47 = vector.load %arg11[%46, %c0_25] : memref<8x32xf32, #tpu.memory_space<vmem>>, vector<1x32xf32>
    tpu.vector_store %arg11[%46, %c0_25], %45 {strides = array<i32>} : memref<8x32xf32, #tpu.memory_space<vmem>>, vector<1x32xf32>,
    %48 = vector.extract_strided_slice %43 {offsets = [1, 32], sizes = [1, 32], strides = [1, 1]} : vector<2x64xf32> to vector<1x32xf32>
    %c7_i32 = arith.constant 7 : i32
    %49 = arith.subi %c7_i32, %c0_i32 : i32
    %50 = arith.index_cast %49 : i32 to index
    %c0_26 = arith.constant 0 : index
    %51 = vector.load %arg12[%50, %c0_26] : memref<8x32xf32, #tpu.memory_space<vmem>>, vector<1x32xf32>
    tpu.vector_store %arg12[%50, %c0_26], %48 {strides = array<i32>} : memref<8x32xf32, #tpu.memory_space<vmem>>, vector<1x32xf32>,
    %c1_i32 = arith.constant 1 : i32
    %52 = arith.index_cast %c1_i32 : i32 to index
    %c0_27 = arith.constant 0 : index
    %c0_28 = arith.constant 0 : index
    %53 = vector.load %arg9[%52, %c0_27, %c0_28] : memref<8x2x192xf32, #tpu.memory_space<vmem>>, vector<1x2x192xf32>
    %54 = vector.shape_cast %53 : vector<1x2x192xf32> to vector<2x192xf32>
    %c0_29 = arith.constant 0 : index
    %c0_30 = arith.constant 0 : index
    %55 = vector.load %arg10[%c0_29, %c0_30] : memref<2x64xf32, #tpu.memory_space<vmem>>, vector<2x64xf32>
    %cst_31 = arith.constant dense<0.000000e+00> : vector<2x192xf32>
    %56 = tpu.matmul %55, %11, %cst_31 {dimension_numbers = #tpu.dot_dimension_numbers<[1], [0], [0], [1], [0, 0, 1, 1], [], []>} : vector<2x64xf32>, vector<64x192xf32>, vector<2x192xf32> -> vector<2x192xf32>
    %57 = vector.extract_strided_slice %54 {offsets = [0, 0], sizes = [2, 64], strides = [1, 1]} : vector<2x192xf32> to vector<2x64xf32>
    %58 = vector.extract_strided_slice %56 {offsets = [0, 0], sizes = [2, 64], strides = [1, 1]} : vector<2x192xf32> to vector<2x64xf32>
    %59 = arith.addf %57, %58 : vector<2x64xf32>
    %60 = arith.negf %59 : vector<2x64xf32>
    %61 = math.exp %60 : vector<2x64xf32>
    %cst_32 = arith.constant 1.000000e+00 : f32
    %62 = vector.broadcast %cst_32 : f32 to vector<2x64xf32>
    %63 = arith.addf %62, %61 : vector<2x64xf32>
    %64 = arith.divf %62, %63 : vector<2x64xf32>
    %65 = vector.extract_strided_slice %54 {offsets = [0, 64], sizes = [2, 64], strides = [1, 1]} : vector<2x192xf32> to vector<2x64xf32>
    %66 = vector.extract_strided_slice %56 {offsets = [0, 64], sizes = [2, 64], strides = [1, 1]} : vector<2x192xf32> to vector<2x64xf32>
    %67 = arith.addf %65, %66 : vector<2x64xf32>
    %68 = arith.negf %67 : vector<2x64xf32>
    %69 = math.exp %68 : vector<2x64xf32>
    %cst_33 = arith.constant 1.000000e+00 : f32
    %70 = vector.broadcast %cst_33 : f32 to vector<2x64xf32>
    %71 = arith.addf %70, %69 : vector<2x64xf32>
    %72 = arith.divf %70, %71 : vector<2x64xf32>
    %73 = vector.extract_strided_slice %54 {offsets = [0, 128], sizes = [2, 64], strides = [1, 1]} : vector<2x192xf32> to vector<2x64xf32>
    %74 = vector.extract_strided_slice %56 {offsets = [0, 128], sizes = [2, 64], strides = [1, 1]} : vector<2x192xf32> to vector<2x64xf32>
    %75 = vector.broadcast %12 : vector<1x64xf32> to vector<2x64xf32>
    %76 = arith.addf %74, %75 : vector<2x64xf32>
    %77 = arith.mulf %64, %76 : vector<2x64xf32>
    %78 = arith.addf %73, %77 : vector<2x64xf32>
    %79 = math.tanh %78 : vector<2x64xf32>
    %80 = arith.subf %55, %79 : vector<2x64xf32>
    %81 = arith.mulf %72, %80 : vector<2x64xf32>
    %82 = arith.addf %79, %81 : vector<2x64xf32>
    %c0_34 = arith.constant 0 : index
    %c0_35 = arith.constant 0 : index
    %83 = vector.load %arg10[%c0_34, %c0_35] : memref<2x64xf32, #tpu.memory_space<vmem>>, vector<2x64xf32>
    tpu.vector_store %arg10[%c0_34, %c0_35], %82 {strides = array<i32>} : memref<2x64xf32, #tpu.memory_space<vmem>>, vector<2x64xf32>,
    %84 = vector.extract_strided_slice %82 {offsets = [1, 0], sizes = [1, 32], strides = [1, 1]} : vector<2x64xf32> to vector<1x32xf32>
    %85 = arith.index_cast %c1_i32 : i32 to index
    %c0_36 = arith.constant 0 : index
    %86 = vector.load %arg11[%85, %c0_36] : memref<8x32xf32, #tpu.memory_space<vmem>>, vector<1x32xf32>
    tpu.vector_store %arg11[%85, %c0_36], %84 {strides = array<i32>} : memref<8x32xf32, #tpu.memory_space<vmem>>, vector<1x32xf32>,
    %87 = vector.extract_strided_slice %82 {offsets = [1, 32], sizes = [1, 32], strides = [1, 1]} : vector<2x64xf32> to vector<1x32xf32>
    %c7_i32_37 = arith.constant 7 : i32
    %88 = arith.subi %c7_i32_37, %c1_i32 : i32
    %89 = arith.index_cast %88 : i32 to index
    %c0_38 = arith.constant 0 : index
    %90 = vector.load %arg12[%89, %c0_38] : memref<8x32xf32, #tpu.memory_space<vmem>>, vector<1x32xf32>
    tpu.vector_store %arg12[%89, %c0_38], %87 {strides = array<i32>} : memref<8x32xf32, #tpu.memory_space<vmem>>, vector<1x32xf32>,
    %c2_i32 = arith.constant 2 : i32
    %91 = arith.index_cast %c2_i32 : i32 to index
    %c0_39 = arith.constant 0 : index
    %c0_40 = arith.constant 0 : index
    %92 = vector.load %arg9[%91, %c0_39, %c0_40] : memref<8x2x192xf32, #tpu.memory_space<vmem>>, vector<1x2x192xf32>
    %93 = vector.shape_cast %92 : vector<1x2x192xf32> to vector<2x192xf32>
    %c0_41 = arith.constant 0 : index
    %c0_42 = arith.constant 0 : index
    %94 = vector.load %arg10[%c0_41, %c0_42] : memref<2x64xf32, #tpu.memory_space<vmem>>, vector<2x64xf32>
    %cst_43 = arith.constant dense<0.000000e+00> : vector<2x192xf32>
    %95 = tpu.matmul %94, %11, %cst_43 {dimension_numbers = #tpu.dot_dimension_numbers<[1], [0], [0], [1], [0, 0, 1, 1], [], []>} : vector<2x64xf32>, vector<64x192xf32>, vector<2x192xf32> -> vector<2x192xf32>
    %96 = vector.extract_strided_slice %93 {offsets = [0, 0], sizes = [2, 64], strides = [1, 1]} : vector<2x192xf32> to vector<2x64xf32>
    %97 = vector.extract_strided_slice %95 {offsets = [0, 0], sizes = [2, 64], strides = [1, 1]} : vector<2x192xf32> to vector<2x64xf32>
    %98 = arith.addf %96, %97 : vector<2x64xf32>
    %99 = arith.negf %98 : vector<2x64xf32>
    %100 = math.exp %99 : vector<2x64xf32>
    %cst_44 = arith.constant 1.000000e+00 : f32
    %101 = vector.broadcast %cst_44 : f32 to vector<2x64xf32>
    %102 = arith.addf %101, %100 : vector<2x64xf32>
    %103 = arith.divf %101, %102 : vector<2x64xf32>
    %104 = vector.extract_strided_slice %93 {offsets = [0, 64], sizes = [2, 64], strides = [1, 1]} : vector<2x192xf32> to vector<2x64xf32>
    %105 = vector.extract_strided_slice %95 {offsets = [0, 64], sizes = [2, 64], strides = [1, 1]} : vector<2x192xf32> to vector<2x64xf32>
    %106 = arith.addf %104, %105 : vector<2x64xf32>
    %107 = arith.negf %106 : vector<2x64xf32>
    %108 = math.exp %107 : vector<2x64xf32>
    %cst_45 = arith.constant 1.000000e+00 : f32
    %109 = vector.broadcast %cst_45 : f32 to vector<2x64xf32>
    %110 = arith.addf %109, %108 : vector<2x64xf32>
    %111 = arith.divf %109, %110 : vector<2x64xf32>
    %112 = vector.extract_strided_slice %93 {offsets = [0, 128], sizes = [2, 64], strides = [1, 1]} : vector<2x192xf32> to vector<2x64xf32>
    %113 = vector.extract_strided_slice %95 {offsets = [0, 128], sizes = [2, 64], strides = [1, 1]} : vector<2x192xf32> to vector<2x64xf32>
    %114 = vector.broadcast %12 : vector<1x64xf32> to vector<2x64xf32>
    %115 = arith.addf %113, %114 : vector<2x64xf32>
    %116 = arith.mulf %103, %115 : vector<2x64xf32>
    %117 = arith.addf %112, %116 : vector<2x64xf32>
    %118 = math.tanh %117 : vector<2x64xf32>
    %119 = arith.subf %94, %118 : vector<2x64xf32>
    %120 = arith.mulf %111, %119 : vector<2x64xf32>
    %121 = arith.addf %118, %120 : vector<2x64xf32>
    %c0_46 = arith.constant 0 : index
    %c0_47 = arith.constant 0 : index
    %122 = vector.load %arg10[%c0_46, %c0_47] : memref<2x64xf32, #tpu.memory_space<vmem>>, vector<2x64xf32>
    tpu.vector_store %arg10[%c0_46, %c0_47], %121 {strides = array<i32>} : memref<2x64xf32, #tpu.memory_space<vmem>>, vector<2x64xf32>,
    %123 = vector.extract_strided_slice %121 {offsets = [1, 0], sizes = [1, 32], strides = [1, 1]} : vector<2x64xf32> to vector<1x32xf32>
    %124 = arith.index_cast %c2_i32 : i32 to index
    %c0_48 = arith.constant 0 : index
    %125 = vector.load %arg11[%124, %c0_48] : memref<8x32xf32, #tpu.memory_space<vmem>>, vector<1x32xf32>
    tpu.vector_store %arg11[%124, %c0_48], %123 {strides = array<i32>} : memref<8x32xf32, #tpu.memory_space<vmem>>, vector<1x32xf32>,
    %126 = vector.extract_strided_slice %121 {offsets = [1, 32], sizes = [1, 32], strides = [1, 1]} : vector<2x64xf32> to vector<1x32xf32>
    %c7_i32_49 = arith.constant 7 : i32
    %127 = arith.subi %c7_i32_49, %c2_i32 : i32
    %128 = arith.index_cast %127 : i32 to index
    %c0_50 = arith.constant 0 : index
    %129 = vector.load %arg12[%128, %c0_50] : memref<8x32xf32, #tpu.memory_space<vmem>>, vector<1x32xf32>
    tpu.vector_store %arg12[%128, %c0_50], %126 {strides = array<i32>} : memref<8x32xf32, #tpu.memory_space<vmem>>, vector<1x32xf32>,
    %c3_i32 = arith.constant 3 : i32
    %130 = arith.index_cast %c3_i32 : i32 to index
    %c0_51 = arith.constant 0 : index
    %c0_52 = arith.constant 0 : index
    %131 = vector.load %arg9[%130, %c0_51, %c0_52] : memref<8x2x192xf32, #tpu.memory_space<vmem>>, vector<1x2x192xf32>
    %132 = vector.shape_cast %131 : vector<1x2x192xf32> to vector<2x192xf32>
    %c0_53 = arith.constant 0 : index
    %c0_54 = arith.constant 0 : index
    %133 = vector.load %arg10[%c0_53, %c0_54] : memref<2x64xf32, #tpu.memory_space<vmem>>, vector<2x64xf32>
    %cst_55 = arith.constant dense<0.000000e+00> : vector<2x192xf32>
    %134 = tpu.matmul %133, %11, %cst_55 {dimension_numbers = #tpu.dot_dimension_numbers<[1], [0], [0], [1], [0, 0, 1, 1], [], []>} : vector<2x64xf32>, vector<64x192xf32>, vector<2x192xf32> -> vector<2x192xf32>
    %135 = vector.extract_strided_slice %132 {offsets = [0, 0], sizes = [2, 64], strides = [1, 1]} : vector<2x192xf32> to vector<2x64xf32>
    %136 = vector.extract_strided_slice %134 {offsets = [0, 0], sizes = [2, 64], strides = [1, 1]} : vector<2x192xf32> to vector<2x64xf32>
    %137 = arith.addf %135, %136 : vector<2x64xf32>
    %138 = arith.negf %137 : vector<2x64xf32>
    %139 = math.exp %138 : vector<2x64xf32>
    %cst_56 = arith.constant 1.000000e+00 : f32
    %140 = vector.broadcast %cst_56 : f32 to vector<2x64xf32>
    %141 = arith.addf %140, %139 : vector<2x64xf32>
    %142 = arith.divf %140, %141 : vector<2x64xf32>
    %143 = vector.extract_strided_slice %132 {offsets = [0, 64], sizes = [2, 64], strides = [1, 1]} : vector<2x192xf32> to vector<2x64xf32>
    %144 = vector.extract_strided_slice %134 {offsets = [0, 64], sizes = [2, 64], strides = [1, 1]} : vector<2x192xf32> to vector<2x64xf32>
    %145 = arith.addf %143, %144 : vector<2x64xf32>
    %146 = arith.negf %145 : vector<2x64xf32>
    %147 = math.exp %146 : vector<2x64xf32>
    %cst_57 = arith.constant 1.000000e+00 : f32
    %148 = vector.broadcast %cst_57 : f32 to vector<2x64xf32>
    %149 = arith.addf %148, %147 : vector<2x64xf32>
    %150 = arith.divf %148, %149 : vector<2x64xf32>
    %151 = vector.extract_strided_slice %132 {offsets = [0, 128], sizes = [2, 64], strides = [1, 1]} : vector<2x192xf32> to vector<2x64xf32>
    %152 = vector.extract_strided_slice %134 {offsets = [0, 128], sizes = [2, 64], strides = [1, 1]} : vector<2x192xf32> to vector<2x64xf32>
    %153 = vector.broadcast %12 : vector<1x64xf32> to vector<2x64xf32>
    %154 = arith.addf %152, %153 : vector<2x64xf32>
    %155 = arith.mulf %142, %154 : vector<2x64xf32>
    %156 = arith.addf %151, %155 : vector<2x64xf32>
    %157 = math.tanh %156 : vector<2x64xf32>
    %158 = arith.subf %133, %157 : vector<2x64xf32>
    %159 = arith.mulf %150, %158 : vector<2x64xf32>
    %160 = arith.addf %157, %159 : vector<2x64xf32>
    %c0_58 = arith.constant 0 : index
    %c0_59 = arith.constant 0 : index
    %161 = vector.load %arg10[%c0_58, %c0_59] : memref<2x64xf32, #tpu.memory_space<vmem>>, vector<2x64xf32>
    tpu.vector_store %arg10[%c0_58, %c0_59], %160 {strides = array<i32>} : memref<2x64xf32, #tpu.memory_space<vmem>>, vector<2x64xf32>,
    %162 = vector.extract_strided_slice %160 {offsets = [1, 0], sizes = [1, 32], strides = [1, 1]} : vector<2x64xf32> to vector<1x32xf32>
    %163 = arith.index_cast %c3_i32 : i32 to index
    %c0_60 = arith.constant 0 : index
    %164 = vector.load %arg11[%163, %c0_60] : memref<8x32xf32, #tpu.memory_space<vmem>>, vector<1x32xf32>
    tpu.vector_store %arg11[%163, %c0_60], %162 {strides = array<i32>} : memref<8x32xf32, #tpu.memory_space<vmem>>, vector<1x32xf32>,
    %165 = vector.extract_strided_slice %160 {offsets = [1, 32], sizes = [1, 32], strides = [1, 1]} : vector<2x64xf32> to vector<1x32xf32>
    %c7_i32_61 = arith.constant 7 : i32
    %166 = arith.subi %c7_i32_61, %c3_i32 : i32
    %167 = arith.index_cast %166 : i32 to index
    %c0_62 = arith.constant 0 : index
    %168 = vector.load %arg12[%167, %c0_62] : memref<8x32xf32, #tpu.memory_space<vmem>>, vector<1x32xf32>
    tpu.vector_store %arg12[%167, %c0_62], %165 {strides = array<i32>} : memref<8x32xf32, #tpu.memory_space<vmem>>, vector<1x32xf32>,
    %c4_i32 = arith.constant 4 : i32
    %169 = arith.index_cast %c4_i32 : i32 to index
    %c0_63 = arith.constant 0 : index
    %c0_64 = arith.constant 0 : index
    %170 = vector.load %arg9[%169, %c0_63, %c0_64] : memref<8x2x192xf32, #tpu.memory_space<vmem>>, vector<1x2x192xf32>
    %171 = vector.shape_cast %170 : vector<1x2x192xf32> to vector<2x192xf32>
    %c0_65 = arith.constant 0 : index
    %c0_66 = arith.constant 0 : index
    %172 = vector.load %arg10[%c0_65, %c0_66] : memref<2x64xf32, #tpu.memory_space<vmem>>, vector<2x64xf32>
    %cst_67 = arith.constant dense<0.000000e+00> : vector<2x192xf32>
    %173 = tpu.matmul %172, %11, %cst_67 {dimension_numbers = #tpu.dot_dimension_numbers<[1], [0], [0], [1], [0, 0, 1, 1], [], []>} : vector<2x64xf32>, vector<64x192xf32>, vector<2x192xf32> -> vector<2x192xf32>
    %174 = vector.extract_strided_slice %171 {offsets = [0, 0], sizes = [2, 64], strides = [1, 1]} : vector<2x192xf32> to vector<2x64xf32>
    %175 = vector.extract_strided_slice %173 {offsets = [0, 0], sizes = [2, 64], strides = [1, 1]} : vector<2x192xf32> to vector<2x64xf32>
    %176 = arith.addf %174, %175 : vector<2x64xf32>
    %177 = arith.negf %176 : vector<2x64xf32>
    %178 = math.exp %177 : vector<2x64xf32>
    %cst_68 = arith.constant 1.000000e+00 : f32
    %179 = vector.broadcast %cst_68 : f32 to vector<2x64xf32>
    %180 = arith.addf %179, %178 : vector<2x64xf32>
    %181 = arith.divf %179, %180 : vector<2x64xf32>
    %182 = vector.extract_strided_slice %171 {offsets = [0, 64], sizes = [2, 64], strides = [1, 1]} : vector<2x192xf32> to vector<2x64xf32>
    %183 = vector.extract_strided_slice %173 {offsets = [0, 64], sizes = [2, 64], strides = [1, 1]} : vector<2x192xf32> to vector<2x64xf32>
    %184 = arith.addf %182, %183 : vector<2x64xf32>
    %185 = arith.negf %184 : vector<2x64xf32>
    %186 = math.exp %185 : vector<2x64xf32>
    %cst_69 = arith.constant 1.000000e+00 : f32
    %187 = vector.broadcast %cst_69 : f32 to vector<2x64xf32>
    %188 = arith.addf %187, %186 : vector<2x64xf32>
    %189 = arith.divf %187, %188 : vector<2x64xf32>
    %190 = vector.extract_strided_slice %171 {offsets = [0, 128], sizes = [2, 64], strides = [1, 1]} : vector<2x192xf32> to vector<2x64xf32>
    %191 = vector.extract_strided_slice %173 {offsets = [0, 128], sizes = [2, 64], strides = [1, 1]} : vector<2x192xf32> to vector<2x64xf32>
    %192 = vector.broadcast %12 : vector<1x64xf32> to vector<2x64xf32>
    %193 = arith.addf %191, %192 : vector<2x64xf32>
    %194 = arith.mulf %181, %193 : vector<2x64xf32>
    %195 = arith.addf %190, %194 : vector<2x64xf32>
    %196 = math.tanh %195 : vector<2x64xf32>
    %197 = arith.subf %172, %196 : vector<2x64xf32>
    %198 = arith.mulf %189, %197 : vector<2x64xf32>
    %199 = arith.addf %196, %198 : vector<2x64xf32>
    %c0_70 = arith.constant 0 : index
    %c0_71 = arith.constant 0 : index
    %200 = vector.load %arg10[%c0_70, %c0_71] : memref<2x64xf32, #tpu.memory_space<vmem>>, vector<2x64xf32>
    tpu.vector_store %arg10[%c0_70, %c0_71], %199 {strides = array<i32>} : memref<2x64xf32, #tpu.memory_space<vmem>>, vector<2x64xf32>,
    %201 = vector.extract_strided_slice %199 {offsets = [1, 0], sizes = [1, 32], strides = [1, 1]} : vector<2x64xf32> to vector<1x32xf32>
    %202 = arith.index_cast %c4_i32 : i32 to index
    %c0_72 = arith.constant 0 : index
    %203 = vector.load %arg11[%202, %c0_72] : memref<8x32xf32, #tpu.memory_space<vmem>>, vector<1x32xf32>
    tpu.vector_store %arg11[%202, %c0_72], %201 {strides = array<i32>} : memref<8x32xf32, #tpu.memory_space<vmem>>, vector<1x32xf32>,
    %204 = vector.extract_strided_slice %199 {offsets = [1, 32], sizes = [1, 32], strides = [1, 1]} : vector<2x64xf32> to vector<1x32xf32>
    %c7_i32_73 = arith.constant 7 : i32
    %205 = arith.subi %c7_i32_73, %c4_i32 : i32
    %206 = arith.index_cast %205 : i32 to index
    %c0_74 = arith.constant 0 : index
    %207 = vector.load %arg12[%206, %c0_74] : memref<8x32xf32, #tpu.memory_space<vmem>>, vector<1x32xf32>
    tpu.vector_store %arg12[%206, %c0_74], %204 {strides = array<i32>} : memref<8x32xf32, #tpu.memory_space<vmem>>, vector<1x32xf32>,
    %c5_i32 = arith.constant 5 : i32
    %208 = arith.index_cast %c5_i32 : i32 to index
    %c0_75 = arith.constant 0 : index
    %c0_76 = arith.constant 0 : index
    %209 = vector.load %arg9[%208, %c0_75, %c0_76] : memref<8x2x192xf32, #tpu.memory_space<vmem>>, vector<1x2x192xf32>
    %210 = vector.shape_cast %209 : vector<1x2x192xf32> to vector<2x192xf32>
    %c0_77 = arith.constant 0 : index
    %c0_78 = arith.constant 0 : index
    %211 = vector.load %arg10[%c0_77, %c0_78] : memref<2x64xf32, #tpu.memory_space<vmem>>, vector<2x64xf32>
    %cst_79 = arith.constant dense<0.000000e+00> : vector<2x192xf32>
    %212 = tpu.matmul %211, %11, %cst_79 {dimension_numbers = #tpu.dot_dimension_numbers<[1], [0], [0], [1], [0, 0, 1, 1], [], []>} : vector<2x64xf32>, vector<64x192xf32>, vector<2x192xf32> -> vector<2x192xf32>
    %213 = vector.extract_strided_slice %210 {offsets = [0, 0], sizes = [2, 64], strides = [1, 1]} : vector<2x192xf32> to vector<2x64xf32>
    %214 = vector.extract_strided_slice %212 {offsets = [0, 0], sizes = [2, 64], strides = [1, 1]} : vector<2x192xf32> to vector<2x64xf32>
    %215 = arith.addf %213, %214 : vector<2x64xf32>
    %216 = arith.negf %215 : vector<2x64xf32>
    %217 = math.exp %216 : vector<2x64xf32>
    %cst_80 = arith.constant 1.000000e+00 : f32
    %218 = vector.broadcast %cst_80 : f32 to vector<2x64xf32>
    %219 = arith.addf %218, %217 : vector<2x64xf32>
    %220 = arith.divf %218, %219 : vector<2x64xf32>
    %221 = vector.extract_strided_slice %210 {offsets = [0, 64], sizes = [2, 64], strides = [1, 1]} : vector<2x192xf32> to vector<2x64xf32>
    %222 = vector.extract_strided_slice %212 {offsets = [0, 64], sizes = [2, 64], strides = [1, 1]} : vector<2x192xf32> to vector<2x64xf32>
    %223 = arith.addf %221, %222 : vector<2x64xf32>
    %224 = arith.negf %223 : vector<2x64xf32>
    %225 = math.exp %224 : vector<2x64xf32>
    %cst_81 = arith.constant 1.000000e+00 : f32
    %226 = vector.broadcast %cst_81 : f32 to vector<2x64xf32>
    %227 = arith.addf %226, %225 : vector<2x64xf32>
    %228 = arith.divf %226, %227 : vector<2x64xf32>
    %229 = vector.extract_strided_slice %210 {offsets = [0, 128], sizes = [2, 64], strides = [1, 1]} : vector<2x192xf32> to vector<2x64xf32>
    %230 = vector.extract_strided_slice %212 {offsets = [0, 128], sizes = [2, 64], strides = [1, 1]} : vector<2x192xf32> to vector<2x64xf32>
    %231 = vector.broadcast %12 : vector<1x64xf32> to vector<2x64xf32>
    %232 = arith.addf %230, %231 : vector<2x64xf32>
    %233 = arith.mulf %220, %232 : vector<2x64xf32>
    %234 = arith.addf %229, %233 : vector<2x64xf32>
    %235 = math.tanh %234 : vector<2x64xf32>
    %236 = arith.subf %211, %235 : vector<2x64xf32>
    %237 = arith.mulf %228, %236 : vector<2x64xf32>
    %238 = arith.addf %235, %237 : vector<2x64xf32>
    %c0_82 = arith.constant 0 : index
    %c0_83 = arith.constant 0 : index
    %239 = vector.load %arg10[%c0_82, %c0_83] : memref<2x64xf32, #tpu.memory_space<vmem>>, vector<2x64xf32>
    tpu.vector_store %arg10[%c0_82, %c0_83], %238 {strides = array<i32>} : memref<2x64xf32, #tpu.memory_space<vmem>>, vector<2x64xf32>,
    %240 = vector.extract_strided_slice %238 {offsets = [1, 0], sizes = [1, 32], strides = [1, 1]} : vector<2x64xf32> to vector<1x32xf32>
    %241 = arith.index_cast %c5_i32 : i32 to index
    %c0_84 = arith.constant 0 : index
    %242 = vector.load %arg11[%241, %c0_84] : memref<8x32xf32, #tpu.memory_space<vmem>>, vector<1x32xf32>
    tpu.vector_store %arg11[%241, %c0_84], %240 {strides = array<i32>} : memref<8x32xf32, #tpu.memory_space<vmem>>, vector<1x32xf32>,
    %243 = vector.extract_strided_slice %238 {offsets = [1, 32], sizes = [1, 32], strides = [1, 1]} : vector<2x64xf32> to vector<1x32xf32>
    %c7_i32_85 = arith.constant 7 : i32
    %244 = arith.subi %c7_i32_85, %c5_i32 : i32
    %245 = arith.index_cast %244 : i32 to index
    %c0_86 = arith.constant 0 : index
    %246 = vector.load %arg12[%245, %c0_86] : memref<8x32xf32, #tpu.memory_space<vmem>>, vector<1x32xf32>
    tpu.vector_store %arg12[%245, %c0_86], %243 {strides = array<i32>} : memref<8x32xf32, #tpu.memory_space<vmem>>, vector<1x32xf32>,
    %c6_i32 = arith.constant 6 : i32
    %247 = arith.index_cast %c6_i32 : i32 to index
    %c0_87 = arith.constant 0 : index
    %c0_88 = arith.constant 0 : index
    %248 = vector.load %arg9[%247, %c0_87, %c0_88] : memref<8x2x192xf32, #tpu.memory_space<vmem>>, vector<1x2x192xf32>
    %249 = vector.shape_cast %248 : vector<1x2x192xf32> to vector<2x192xf32>
    %c0_89 = arith.constant 0 : index
    %c0_90 = arith.constant 0 : index
    %250 = vector.load %arg10[%c0_89, %c0_90] : memref<2x64xf32, #tpu.memory_space<vmem>>, vector<2x64xf32>
    %cst_91 = arith.constant dense<0.000000e+00> : vector<2x192xf32>
    %251 = tpu.matmul %250, %11, %cst_91 {dimension_numbers = #tpu.dot_dimension_numbers<[1], [0], [0], [1], [0, 0, 1, 1], [], []>} : vector<2x64xf32>, vector<64x192xf32>, vector<2x192xf32> -> vector<2x192xf32>
    %252 = vector.extract_strided_slice %249 {offsets = [0, 0], sizes = [2, 64], strides = [1, 1]} : vector<2x192xf32> to vector<2x64xf32>
    %253 = vector.extract_strided_slice %251 {offsets = [0, 0], sizes = [2, 64], strides = [1, 1]} : vector<2x192xf32> to vector<2x64xf32>
    %254 = arith.addf %252, %253 : vector<2x64xf32>
    %255 = arith.negf %254 : vector<2x64xf32>
    %256 = math.exp %255 : vector<2x64xf32>
    %cst_92 = arith.constant 1.000000e+00 : f32
    %257 = vector.broadcast %cst_92 : f32 to vector<2x64xf32>
    %258 = arith.addf %257, %256 : vector<2x64xf32>
    %259 = arith.divf %257, %258 : vector<2x64xf32>
    %260 = vector.extract_strided_slice %249 {offsets = [0, 64], sizes = [2, 64], strides = [1, 1]} : vector<2x192xf32> to vector<2x64xf32>
    %261 = vector.extract_strided_slice %251 {offsets = [0, 64], sizes = [2, 64], strides = [1, 1]} : vector<2x192xf32> to vector<2x64xf32>
    %262 = arith.addf %260, %261 : vector<2x64xf32>
    %263 = arith.negf %262 : vector<2x64xf32>
    %264 = math.exp %263 : vector<2x64xf32>
    %cst_93 = arith.constant 1.000000e+00 : f32
    %265 = vector.broadcast %cst_93 : f32 to vector<2x64xf32>
    %266 = arith.addf %265, %264 : vector<2x64xf32>
    %267 = arith.divf %265, %266 : vector<2x64xf32>
    %268 = vector.extract_strided_slice %249 {offsets = [0, 128], sizes = [2, 64], strides = [1, 1]} : vector<2x192xf32> to vector<2x64xf32>
    %269 = vector.extract_strided_slice %251 {offsets = [0, 128], sizes = [2, 64], strides = [1, 1]} : vector<2x192xf32> to vector<2x64xf32>
    %270 = vector.broadcast %12 : vector<1x64xf32> to vector<2x64xf32>
    %271 = arith.addf %269, %270 : vector<2x64xf32>
    %272 = arith.mulf %259, %271 : vector<2x64xf32>
    %273 = arith.addf %268, %272 : vector<2x64xf32>
    %274 = math.tanh %273 : vector<2x64xf32>
    %275 = arith.subf %250, %274 : vector<2x64xf32>
    %276 = arith.mulf %267, %275 : vector<2x64xf32>
    %277 = arith.addf %274, %276 : vector<2x64xf32>
    %c0_94 = arith.constant 0 : index
    %c0_95 = arith.constant 0 : index
    %278 = vector.load %arg10[%c0_94, %c0_95] : memref<2x64xf32, #tpu.memory_space<vmem>>, vector<2x64xf32>
    tpu.vector_store %arg10[%c0_94, %c0_95], %277 {strides = array<i32>} : memref<2x64xf32, #tpu.memory_space<vmem>>, vector<2x64xf32>,
    %279 = vector.extract_strided_slice %277 {offsets = [1, 0], sizes = [1, 32], strides = [1, 1]} : vector<2x64xf32> to vector<1x32xf32>
    %280 = arith.index_cast %c6_i32 : i32 to index
    %c0_96 = arith.constant 0 : index
    %281 = vector.load %arg11[%280, %c0_96] : memref<8x32xf32, #tpu.memory_space<vmem>>, vector<1x32xf32>
    tpu.vector_store %arg11[%280, %c0_96], %279 {strides = array<i32>} : memref<8x32xf32, #tpu.memory_space<vmem>>, vector<1x32xf32>,
    %282 = vector.extract_strided_slice %277 {offsets = [1, 32], sizes = [1, 32], strides = [1, 1]} : vector<2x64xf32> to vector<1x32xf32>
    %c7_i32_97 = arith.constant 7 : i32
    %283 = arith.subi %c7_i32_97, %c6_i32 : i32
    %284 = arith.index_cast %283 : i32 to index
    %c0_98 = arith.constant 0 : index
    %285 = vector.load %arg12[%284, %c0_98] : memref<8x32xf32, #tpu.memory_space<vmem>>, vector<1x32xf32>
    tpu.vector_store %arg12[%284, %c0_98], %282 {strides = array<i32>} : memref<8x32xf32, #tpu.memory_space<vmem>>, vector<1x32xf32>,
    %c7_i32_99 = arith.constant 7 : i32
    %286 = arith.index_cast %c7_i32_99 : i32 to index
    %c0_100 = arith.constant 0 : index
    %c0_101 = arith.constant 0 : index
    %287 = vector.load %arg9[%286, %c0_100, %c0_101] : memref<8x2x192xf32, #tpu.memory_space<vmem>>, vector<1x2x192xf32>
    %288 = vector.shape_cast %287 : vector<1x2x192xf32> to vector<2x192xf32>
    %c0_102 = arith.constant 0 : index
    %c0_103 = arith.constant 0 : index
    %289 = vector.load %arg10[%c0_102, %c0_103] : memref<2x64xf32, #tpu.memory_space<vmem>>, vector<2x64xf32>
    %cst_104 = arith.constant dense<0.000000e+00> : vector<2x192xf32>
    %290 = tpu.matmul %289, %11, %cst_104 {dimension_numbers = #tpu.dot_dimension_numbers<[1], [0], [0], [1], [0, 0, 1, 1], [], []>} : vector<2x64xf32>, vector<64x192xf32>, vector<2x192xf32> -> vector<2x192xf32>
    %291 = vector.extract_strided_slice %288 {offsets = [0, 0], sizes = [2, 64], strides = [1, 1]} : vector<2x192xf32> to vector<2x64xf32>
    %292 = vector.extract_strided_slice %290 {offsets = [0, 0], sizes = [2, 64], strides = [1, 1]} : vector<2x192xf32> to vector<2x64xf32>
    %293 = arith.addf %291, %292 : vector<2x64xf32>
    %294 = arith.negf %293 : vector<2x64xf32>
    %295 = math.exp %294 : vector<2x64xf32>
    %cst_105 = arith.constant 1.000000e+00 : f32
    %296 = vector.broadcast %cst_105 : f32 to vector<2x64xf32>
    %297 = arith.addf %296, %295 : vector<2x64xf32>
    %298 = arith.divf %296, %297 : vector<2x64xf32>
    %299 = vector.extract_strided_slice %288 {offsets = [0, 64], sizes = [2, 64], strides = [1, 1]} : vector<2x192xf32> to vector<2x64xf32>
    %300 = vector.extract_strided_slice %290 {offsets = [0, 64], sizes = [2, 64], strides = [1, 1]} : vector<2x192xf32> to vector<2x64xf32>
    %301 = arith.addf %299, %300 : vector<2x64xf32>
    %302 = arith.negf %301 : vector<2x64xf32>
    %303 = math.exp %302 : vector<2x64xf32>
    %cst_106 = arith.constant 1.000000e+00 : f32
    %304 = vector.broadcast %cst_106 : f32 to vector<2x64xf32>
    %305 = arith.addf %304, %303 : vector<2x64xf32>
    %306 = arith.divf %304, %305 : vector<2x64xf32>
    %307 = vector.extract_strided_slice %288 {offsets = [0, 128], sizes = [2, 64], strides = [1, 1]} : vector<2x192xf32> to vector<2x64xf32>
    %308 = vector.extract_strided_slice %290 {offsets = [0, 128], sizes = [2, 64], strides = [1, 1]} : vector<2x192xf32> to vector<2x64xf32>
    %309 = vector.broadcast %12 : vector<1x64xf32> to vector<2x64xf32>
    %310 = arith.addf %308, %309 : vector<2x64xf32>
    %311 = arith.mulf %298, %310 : vector<2x64xf32>
    %312 = arith.addf %307, %311 : vector<2x64xf32>
    %313 = math.tanh %312 : vector<2x64xf32>
    %314 = arith.subf %289, %313 : vector<2x64xf32>
    %315 = arith.mulf %306, %314 : vector<2x64xf32>
    %316 = arith.addf %313, %315 : vector<2x64xf32>
    %c0_107 = arith.constant 0 : index
    %c0_108 = arith.constant 0 : index
    %317 = vector.load %arg10[%c0_107, %c0_108] : memref<2x64xf32, #tpu.memory_space<vmem>>, vector<2x64xf32>
    tpu.vector_store %arg10[%c0_107, %c0_108], %316 {strides = array<i32>} : memref<2x64xf32, #tpu.memory_space<vmem>>, vector<2x64xf32>,
    %318 = vector.extract_strided_slice %316 {offsets = [1, 0], sizes = [1, 32], strides = [1, 1]} : vector<2x64xf32> to vector<1x32xf32>
    %319 = arith.index_cast %c7_i32_99 : i32 to index
    %c0_109 = arith.constant 0 : index
    %320 = vector.load %arg11[%319, %c0_109] : memref<8x32xf32, #tpu.memory_space<vmem>>, vector<1x32xf32>
    tpu.vector_store %arg11[%319, %c0_109], %318 {strides = array<i32>} : memref<8x32xf32, #tpu.memory_space<vmem>>, vector<1x32xf32>,
    %321 = vector.extract_strided_slice %316 {offsets = [1, 32], sizes = [1, 32], strides = [1, 1]} : vector<2x64xf32> to vector<1x32xf32>
    %c7_i32_110 = arith.constant 7 : i32
    %322 = arith.subi %c7_i32_110, %c7_i32_99 : i32
    %323 = arith.index_cast %322 : i32 to index
    %c0_111 = arith.constant 0 : index
    %324 = vector.load %arg12[%323, %c0_111] : memref<8x32xf32, #tpu.memory_space<vmem>>, vector<1x32xf32>
    tpu.vector_store %arg12[%323, %c0_111], %321 {strides = array<i32>} : memref<8x32xf32, #tpu.memory_space<vmem>>, vector<1x32xf32>,
    %c8_i32 = arith.constant 8 : i32
    %c0_112 = arith.constant 0 : index
    %c0_113 = arith.constant 0 : index
    %325 = vector.load %arg10[%c0_112, %c0_113] : memref<2x64xf32, #tpu.memory_space<vmem>>, vector<2x32xf32>
    %c0_114 = arith.constant 0 : index
    %c0_115 = arith.constant 0 : index
    %c0_116 = arith.constant 0 : index
    %326 = vector.load %arg8[%c0_114, %c0_115, %c0_116] : memref<2x2x32xf32, #tpu.memory_space<vmem>>, vector<1x2x32xf32>
    %327 = vector.shape_cast %326 : vector<1x2x32xf32> to vector<2x32xf32>
    %328 = vector.shape_cast %325 : vector<2x32xf32> to vector<1x2x32xf32>
    tpu.vector_store %arg8[%c0_114, %c0_115, %c0_116], %328 {strides = array<i32>} : memref<2x2x32xf32, #tpu.memory_space<vmem>>, vector<1x2x32xf32>,
    %c0_117 = arith.constant 0 : index
    %c32 = arith.constant 32 : index
    %329 = vector.load %arg10[%c0_117, %c32] : memref<2x64xf32, #tpu.memory_space<vmem>>, vector<2x32xf32>
    %c1 = arith.constant 1 : index
    %c0_118 = arith.constant 0 : index
    %c0_119 = arith.constant 0 : index
    %330 = vector.load %arg8[%c1, %c0_118, %c0_119] : memref<2x2x32xf32, #tpu.memory_space<vmem>>, vector<1x2x32xf32>
    %331 = vector.shape_cast %330 : vector<1x2x32xf32> to vector<2x32xf32>
    %332 = vector.shape_cast %329 : vector<2x32xf32> to vector<1x2x32xf32>
    tpu.vector_store %arg8[%c1, %c0_118, %c0_119], %332 {strides = array<i32>} : memref<2x2x32xf32, #tpu.memory_space<vmem>>, vector<1x2x32xf32>,
    %c0_120 = arith.constant 0 : index
    %c0_121 = arith.constant 0 : index
    %333 = vector.load %arg11[%c0_120, %c0_121] : memref<8x32xf32, #tpu.memory_space<vmem>>, vector<8x32xf32>
    %c0_122 = arith.constant 0 : index
    %c0_123 = arith.constant 0 : index
    %334 = vector.load %arg12[%c0_122, %c0_123] : memref<8x32xf32, #tpu.memory_space<vmem>>, vector<8x32xf32>
    %335 = tpu.concatenate %333, %334 in 1 : vector<8x32xf32>, vector<8x32xf32> -> vector<8x64xf32>
    %cst_124 = arith.constant 0.000000e+00 : f32
    %336 = vector.broadcast %cst_124 : f32 to vector<8x64xf32>
    %337 = arith.maximumf %335, %336 : vector<8x64xf32>
    %c0_125 = arith.constant 0 : index
    %c0_126 = arith.constant 0 : index
    %338 = vector.load %arg5[%c0_125, %c0_126] : memref<64x10xf32, #tpu.memory_space<vmem>>, vector<64x10xf32>
    %cst_127 = arith.constant dense<0.000000e+00> : vector<8x10xf32>
    %339 = tpu.matmul %337, %338, %cst_127 {dimension_numbers = #tpu.dot_dimension_numbers<[1], [0], [0], [1], [0, 0, 1, 1], [], []>} : vector<8x64xf32>, vector<64x10xf32>, vector<8x10xf32> -> vector<8x10xf32>
    %c0_128 = arith.constant 0 : index
    %c0_129 = arith.constant 0 : index
    %340 = vector.load %arg6[%c0_128, %c0_129] : memref<1x10xf32, #tpu.memory_space<vmem>>, vector<1x10xf32>
    %341 = vector.broadcast %340 : vector<1x10xf32> to vector<8x10xf32>
    %342 = arith.addf %339, %341 : vector<8x10xf32>
    %cst_130 = arith.constant dense<0xFF800000> : vector<8xf32>
    %343 = vector.multi_reduction <maximumf>, %342, %cst_130 [1] : vector<8x10xf32> to vector<8xf32>
    %344 = vector.shape_cast %343 : vector<8xf32> to vector<8x1xf32>
    %345 = vector.broadcast %344 : vector<8x1xf32> to vector<8x10xf32>
    %346 = arith.subf %342, %345 : vector<8x10xf32>
    %347 = math.exp %346 : vector<8x10xf32>
    %cst_131 = arith.constant dense<0.000000e+00> : vector<8xf32>
    %348 = vector.multi_reduction <add>, %347, %cst_131 [1] : vector<8x10xf32> to vector<8xf32>
    %349 = vector.shape_cast %348 : vector<8xf32> to vector<8x1xf32>
    %350 = math.log %349 : vector<8x1xf32>
    %351 = vector.broadcast %350 : vector<8x1xf32> to vector<8x10xf32>
    %352 = arith.subf %346, %351 : vector<8x10xf32>
    %c0_132 = arith.constant 0 : index
    %c0_133 = arith.constant 0 : index
    %353 = vector.load %arg7[%c0_132, %c0_133] : memref<8x10xf32, #tpu.memory_space<vmem>>, vector<8x10xf32>
    tpu.vector_store %arg7[%c0_132, %c0_133], %352 {strides = array<i32>} : memref<8x10xf32, #tpu.memory_space<vmem>>, vector<8x10xf32>,
    return
  }
}

</mosaic_0001>

<llo_original>
// kernel: bi_gru_forward.1
$region0: #{bi_gru_forward.1}
  #allocation0 [shape = 'u32[]', space=smem, size = 0x4, offset = 0x4, fixed_abs, tag = 'smem constant byte address 0x4 - core index']
  #allocation1 [shape = 'u32[144,128]{1,0:T(1,128)}', space=vmem, size = 0x12000, scoped, tag = 'internal scratch']
  #allocation2 [shape = 'f32[8,2,192]{2,1,0:T(2,128)}', space=vmem, size = 0x4000, scoped, tag = 'scratch operand']
  #allocation3 [shape = 'f32[2,64]{1,0:T(2,128)}', space=vmem, size = 0x400, scoped, tag = 'scratch operand']
  #allocation4 [shape = 'f32[8,32]{1,0:T(8,128)}', space=vmem, size = 0x1000, scoped, tag = 'scratch operand']
  #allocation5 [shape = 'f32[8,32]{1,0:T(8,128)}', space=vmem, size = 0x1000, scoped, tag = 'scratch operand']
  %s0 = inlined_call_operand.vmem [shape: f32[8,2,32], index: 0, kind: input, shape index: {}]
  %s1 = inlined_call_operand.vmem [shape: f32[32,192], index: 1, kind: input, shape index: {}]
  %s2 = inlined_call_operand.vmem [shape: f32[64,192], index: 2, kind: input, shape index: {}]
  %s3 = inlined_call_operand.vmem [shape: f32[1,192], index: 3, kind: input, shape index: {}]
  %s4 = inlined_call_operand.vmem [shape: f32[1,64], index: 4, kind: input, shape index: {}]
  %s5 = inlined_call_operand.vmem [shape: f32[64,10], index: 5, kind: input, shape index: {}]
  %s6 = inlined_call_operand.vmem [shape: f32[1,10], index: 6, kind: input, shape index: {}]
  %s7 = inlined_call_operand.hbm [shape: f32[8,10], index: 7, kind: output, shape index: {0}]
  %s8 = inlined_call_operand.hbm [shape: f32[2,2,32], index: 8, kind: output, shape index: {1}]
  %9 = xla_tuple %s7, %s8
  %s10 = sld [smem:[#allocation0]]
  $region46: #{bi_gru_forward.1} parent=0
    _
  %s12 = ssub.s32 1, %s10
  %s13 = scalar_select 0, %s12, %s10
  $region1: #{bi_gru_forward.1} parent=0
    #allocation6 [shape = 'u8[4096]{0}', space=vmem, size = 0x1000, scoped, tag = 'output window, operand 0, single buffered']
    #allocation7 [shape = 's32[1]{0}', space=sflag, size = 0x4, scoped, tag = 'scoped memory for bi_gru_forward.1']
    #allocation8 [shape = 'u8[2048]{0}', space=vmem, size = 0x800, scoped, tag = 'output window, operand 1, single buffered']
    #allocation9 [shape = 's32[1]{0}', space=sflag, size = 0x4, scoped, tag = 'scoped memory for bi_gru_forward.1']
    %14 = vsyncpa [#allocation7], 0
    %15 = vsyncpa [#allocation9], 0
    // Predicated region
    $region2: #{bi_gru_forward.1} parent=1 // pred_check
      _
    $region3: #{bi_gru_forward.1} parent=1 // pred_check_branch
      %17 = sbr.rel (0) target = $region5
    $region4: #{bi_gru_forward.1} parent=1 // pred_region
      _
    $region5: #{bi_gru_forward.1} parent=1 // pred_fallthru
      _
    // Predicated region
    $region6: #{bi_gru_forward.1} parent=1 // pred_check
      _
    $region7: #{bi_gru_forward.1} parent=1 // pred_check_branch
      %19 = sbr.rel (0) target = $region9
    $region8: #{bi_gru_forward.1} parent=1 // pred_region
      _
    $region9: #{bi_gru_forward.1} parent=1 // pred_fallthru
      _
    // Predicated region
    $region10: #{bi_gru_forward.1} parent=1 // pred_check
      _
    $region11: #{bi_gru_forward.1} parent=1 // pred_check_branch
      %21 = sbr.rel (0) target = $region13
    $region12: #{bi_gru_forward.1} parent=1 // pred_region
      _
    $region13: #{bi_gru_forward.1} parent=1 // pred_fallthru
      _
    // Predicated region
    $region14: #{bi_gru_forward.1} parent=1 // pred_check
      _
    $region15: #{bi_gru_forward.1} parent=1 // pred_check_branch
      %23 = sbr.rel (0) target = $region17
    $region16: #{bi_gru_forward.1} parent=1 // pred_region
      _
    $region17: #{bi_gru_forward.1} parent=1 // pred_fallthru
      _
    // Predicated region
    $region18: #{bi_gru_forward.1} parent=1 // pred_check
      _
    $region19: #{bi_gru_forward.1} parent=1 // pred_check_branch
      %25 = sbr.rel (0) target = $region21
    $region20: #{bi_gru_forward.1} parent=1 // pred_region
      _
    $region21: #{bi_gru_forward.1} parent=1 // pred_fallthru
      _
    // Predicated region
    $region22: #{bi_gru_forward.1} parent=1 // pred_check
      _
    $region23: #{bi_gru_forward.1} parent=1 // pred_check_branch
      %27 = sbr.rel (0) target = $region25
    $region24: #{bi_gru_forward.1} parent=1 // pred_region
      _
    $region25: #{bi_gru_forward.1} parent=1 // pred_fallthru
      _
    // Predicated region
    $region26: #{bi_gru_forward.1} parent=1 // pred_check
      _
    $region27: #{bi_gru_forward.1} parent=1 // pred_check_branch
      %29 = sbr.rel (0) target = $region29
    $region28: #{bi_gru_forward.1} parent=1 // pred_region
      _
    $region29: #{bi_gru_forward.1} parent=1 // pred_fallthru
      _
    %v30 = vld [vmem:[%s0] sm:$0x3]
    %v31 = vld [vmem:[%s0 + $0x2] sm:$0x3]
    %v32 = vld [vmem:[%s0 + $0x4] sm:$0x3]
    %v33 = vld [vmem:[%s0 + $0x6] sm:$0x3]
    %v34 = vld [vmem:[%s0 + $0x8] sm:$0x3]
    %v35 = vld [vmem:[%s0 + $0xa] sm:$0x3]
    %v36 = vld [vmem:[%s0 + $0xc] sm:$0x3]
    %v37 = vld [vmem:[%s0 + $0xe] sm:$0x3]
    %v38 = vld [vmem:[%s1] sm:$0xff]
    %v39 = vld [vmem:[%s1 + $0x8] sm:$0xff]
    %v40 = vld [vmem:[%s1 + $0x10] sm:$0xff]
    %v41 = vld [vmem:[%s1 + $0x18] sm:$0xff]
    %v42 = vld [vmem:[%s1 + $0x20] sm:$0xff]
    %v43 = vld [vmem:[%s1 + $0x28] sm:$0xff]
    %v44 = vld [vmem:[%s1 + $0x30] sm:$0xff]
    %v45 = vld [vmem:[%s1 + $0x38] sm:$0xff]
    %v46 = vld [vmem:[%s3] sm:$0x3]
    %v48 = vlaneseq
    %v49 = vshrl.u32 %v48, 7
    %v50 = vsub.s32 0, %v49
    %v51 = vrot.slane %v46, %v50
    %v52 = vlaneseq
    %v53 = vshrl.u32 %v52, 7
    %v54 = vsub.s32 1, %v53
    %v55 = vrot.slane %v46, %v54
    %v66 = vcombine.low %v30, %v31
    %v67 = vcombine.low %v32, %v33
    %v69 = vunpack.c.l.s4 1983009808
    %v70 = vunpack.c.0.s8 %v69
    %v71 = vlaneseq
    %v72 = vshrl.u32 %v71, 7
    %v73 = vsub.s32 %v70, %v72
    %v74 = vrot.slane %v66, %v73
    %v76 = vunpack.c.l.s4 1983009808
    %v77 = vunpack.c.0.s8 %v76
    %v78 = vlaneseq
    %v79 = vshrl.u32 %v78, 7
    %v80 = vsub.s32 %v77, %v79
    %v81 = vrot.slane %v67, %v80
    %v82 = vcombine.low %v74, %v81
    %v83 = vcombine.low %v34, %v35
    %v84 = vcombine.low %v36, %v37
    %v86 = vunpack.c.l.s4 1983009808
    %v87 = vunpack.c.0.s8 %v86
    %v88 = vlaneseq
    %v89 = vshrl.u32 %v88, 7
    %v90 = vsub.s32 %v87, %v89
    %v91 = vrot.slane %v83, %v90
    %v93 = vunpack.c.l.s4 1983009808
    %v94 = vunpack.c.0.s8 %v93
    %v95 = vlaneseq
    %v96 = vshrl.u32 %v95, 7
    %v97 = vsub.s32 %v94, %v96
    %v98 = vrot.slane %v84, %v97
    %v99 = vcombine.low %v91, %v98
    %vm100 = vcmask 261120
    %v101 = vsel %vm100, %v82, 0
    %v103 = vsel %vm100, %v99, 0
    %105 = vmatprep.subr.mxu0 0.0
    %106 = vmatpush1.msra.mxu0 0.0
    %107 = vmatprep.subr.mxu0 0.0
    %108 = vmatpush1.msra.mxu0 0.0
    %109 = vmatprep.subr.mxu0 0.0
    %110 = vmatpush1.msra.mxu0 0.0
    %111 = vmatprep.subr.mxu0 0.0
    %112 = vmatpush1.msra.mxu0 0.0
    %113 = vmatprep.subr.mxu0 0.0
    %114 = vmatpush1.msra.mxu0 0.0
    %115 = vmatprep.subr.mxu0 0.0
    %116 = vmatpush1.msra.mxu0 0.0
    %117 = vmatprep.subr.mxu0 0.0
    %118 = vmatpush1.msra.mxu0 0.0
    %119 = vmatprep.subr.mxu0 0.0
    %120 = vmatpush1.msra.mxu0 0.0
    %121 = vmatprep.subr.mxu0 0.0
    %122 = vmatpush1.msra.mxu0 0.0
    %123 = vmatprep.subr.mxu0 0.0
    %124 = vmatpush1.msra.mxu0 0.0
    %125 = vmatprep.subr.mxu0 0.0
    %126 = vmatpush1.msra.mxu0 0.0
    %127 = vmatprep.subr.mxu0 0.0
    %128 = vmatpush1.msra.mxu0 0.0
    %129 = vmatprep.subr.mxu0 %v45
    %130 = vmatpush1.msra.mxu0 %v44
    %131 = vmatprep.subr.mxu0 %v43
    %132 = vmatpush1.msra.mxu0 %v42
    %133 = vmatprep.subr.mxu0 %v41
    %134 = vmatpush1.msra.mxu0 %v40
    %135 = vmatprep.subr.mxu0 %v39
    %136 = vmatpush1.msra.mxu0 %v38
    %137 = vmatprep.subr.mxu0 0.0
    %138 = vmatpush2.msra.mxu0 0.0
    %139 = vmatprep.subr.mxu0 0.0
    %140 = vmatpush2.msra.mxu0 0.0
    %141 = vmatprep.subr.mxu0 0.0
    %142 = vmatpush2.msra.mxu0 0.0
    %143 = vmatprep.subr.mxu0 0.0
    %144 = vmatpush2.msra.mxu0 0.0
    %145 = vmatprep.subr.mxu0 0.0
    %146 = vmatpush2.msra.mxu0 0.0
    %147 = vmatprep.subr.mxu0 0.0
    %148 = vmatpush2.msra.mxu0 0.0
    %149 = vmatprep.subr.mxu0 0.0
    %150 = vmatpush2.msra.mxu0 0.0
    %151 = vmatprep.subr.mxu0 0.0
    %152 = vmatpush2.msra.mxu0 0.0
    %153 = vmatprep.subr.mxu0 0.0
    %154 = vmatpush2.msra.mxu0 0.0
    %155 = vmatprep.subr.mxu0 0.0
    %156 = vmatpush2.msra.mxu0 0.0
    %157 = vmatprep.subr.mxu0 0.0
    %158 = vmatpush2.msra.mxu0 0.0
    %159 = vmatprep.subr.mxu0 0.0
    %160 = vmatpush2.msra.mxu0 0.0
    %161 = vmatprep.subr.mxu0 0.0
    %162 = vmatpush2.msra.mxu0 0.0
    %163 = vmatprep.subr.mxu0 0.0
    %164 = vmatpush2.msra.mxu0 0.0
    %165 = vmatprep.subr.mxu0 0.0
    %166 = vmatpush2.msra.mxu0 0.0
    %167 = vmatprep.subr.mxu0 0.0
    %168 = vmatpush2.msra.mxu0 0.0
    %169 = vmatprep.mubr.f32.mxu0 0.0
    %170 = vmatmul.mubr.f32.gmra.mxu0 %v101
    %v171 = vpop.f32.mrf.mxu0
    %v172 = vadd.f32 %v51, %v171
    %v173 = vpop.f32.mrf.mxu0
    %v174 = vadd.f32 %v55, %v173
    %175 = vmatprep.mubr.f32.mxu0 0.0
    %176 = vmatmul.mubr.f32.gmra.mxu0 %v103
    %v177 = vpop.f32.mrf.mxu0
    %v178 = vadd.f32 %v51, %v177
    %v179 = vpop.f32.mrf.mxu0
    %v180 = vadd.f32 %v55, %v179
    %181 = vdwg.mxu0
    %v186 = vcombine.low %v172, %v174
    %v187 = vcombine.high %v172, %v174
    %v189 = vunpack.c.l.s4 1983009808
    %v190 = vunpack.c.0.s8 %v189
    %v191 = vlaneseq
    %v192 = vshrl.u32 %v191, 7
    %v193 = vsub.s32 %v190, %v192
    %v194 = vrot.slane %v186, %v193
    %v196 = vunpack.c.l.s4 1983009808
    %v197 = vunpack.c.0.s8 %v196
    %v198 = vlaneseq
    %v199 = vshrl.u32 %v198, 7
    %v200 = vsub.s32 %v197, %v199
    %v201 = vrot.slane %v187, %v200
    %v202 = vcombine.high %v194, %v194
    %v203 = vcombine.high %v201, %v201
    %v204 = vcombine.low %v178, %v180
    %v205 = vcombine.high %v178, %v180
    %v207 = vunpack.c.l.s4 1983009808
    %v208 = vunpack.c.0.s8 %v207
    %v209 = vlaneseq
    %v210 = vshrl.u32 %v209, 7
    %v211 = vsub.s32 %v208, %v210
    %v212 = vrot.slane %v204, %v211
    %v214 = vunpack.c.l.s4 1983009808
    %v215 = vunpack.c.0.s8 %v214
    %v216 = vlaneseq
    %v217 = vshrl.u32 %v216, 7
    %v218 = vsub.s32 %v215, %v217
    %v219 = vrot.slane %v205, %v218
    %v220 = vcombine.high %v212, %v212
    %v221 = vcombine.high %v219, %v219
    %vm230 = vcmask 1041408
    %vm231 = vcmask 519170
    %vm232 = vmor %vm231, %vm230
    %233 = vst.msk [vmem:[#allocation2] sm:$0xf] %vm232, %v194
    %234 = vst.msk [vmem:[#allocation2 + $0x4] sm:$0xf] %vm232, %v202
    %235 = vst.msk [vmem:[#allocation2 + $0x8] sm:$0xf] %vm232, %v201
    %236 = vst.msk [vmem:[#allocation2 + $0xc] sm:$0xf] %vm232, %v203
    %237 = vst.msk [vmem:[#allocation2 + $0x10] sm:$0xf] %vm232, %v212
    %238 = vst.msk [vmem:[#allocation2 + $0x14] sm:$0xf] %vm232, %v220
    %239 = vst.msk [vmem:[#allocation2 + $0x18] sm:$0xf] %vm232, %v219
    %240 = vst.msk [vmem:[#allocation2 + $0x1c] sm:$0xf] %vm232, %v221
    %vm241 = vcmask 517120
    %242 = vst.msk [vmem:[#allocation3] sm:$0x3] %vm241, 0.0
    %v243 = vld [vmem:[%s2] sm:$0xff]
    %v244 = vld [vmem:[%s2 + $0x8] sm:$0xff]
    %v245 = vld [vmem:[%s2 + $0x10] sm:$0xff]
    %v246 = vld [vmem:[%s2 + $0x18] sm:$0xff]
    %v247 = vld [vmem:[%s2 + $0x20] sm:$0xff]
    %v248 = vld [vmem:[%s2 + $0x28] sm:$0xff]
    %v249 = vld [vmem:[%s2 + $0x30] sm:$0xff]
    %v250 = vld [vmem:[%s2 + $0x38] sm:$0xff]
    %v251 = vld [vmem:[%s2 + $0x40] sm:$0xff]
    %v252 = vld [vmem:[%s2 + $0x48] sm:$0xff]
    %v253 = vld [vmem:[%s2 + $0x50] sm:$0xff]
    %v254 = vld [vmem:[%s2 + $0x58] sm:$0xff]
    %v255 = vld [vmem:[%s2 + $0x60] sm:$0xff]
    %v256 = vld [vmem:[%s2 + $0x68] sm:$0xff]
    %v257 = vld [vmem:[%s2 + $0x70] sm:$0xff]
    %v258 = vld [vmem:[%s2 + $0x78] sm:$0xff]
    %v259 = vld [vmem:[%s4] sm:$0x1]
    %v260 = vld [vmem:[#allocation2] sm:$0xf]
    %v261 = vld [vmem:[#allocation3] sm:$0x3]
    %vm262 = vcmask 523264
    %v264 = vsel %vm262, %v261, 0
    %266 = vmatprep.subr.mxu0 0.0
    %267 = vmatpush1.msra.mxu0 0.0
    %268 = vmatprep.subr.mxu0 0.0
    %269 = vmatpush1.msra.mxu0 0.0
    %270 = vmatprep.subr.mxu0 0.0
    %271 = vmatpush1.msra.mxu0 0.0
    %272 = vmatprep.subr.mxu0 0.0
    %273 = vmatpush1.msra.mxu0 0.0
    %274 = vmatprep.subr.mxu0 0.0
    %275 = vmatpush1.msra.mxu0 0.0
    %276 = vmatprep.subr.mxu0 0.0
    %277 = vmatpush1.msra.mxu0 0.0
    %278 = vmatprep.subr.mxu0 0.0
    %279 = vmatpush1.msra.mxu0 0.0
    %280 = vmatprep.subr.mxu0 0.0
    %281 = vmatpush1.msra.mxu0 0.0
    %282 = vmatprep.subr.mxu0 %v258
    %283 = vmatpush1.msra.mxu0 %v257
    %284 = vmatprep.subr.mxu0 %v256
    %285 = vmatpush1.msra.mxu0 %v255
    %286 = vmatprep.subr.mxu0 %v254
    %287 = vmatpush1.msra.mxu0 %v253
    %288 = vmatprep.subr.mxu0 %v252
    %289 = vmatpush1.msra.mxu0 %v251
    %290 = vmatprep.subr.mxu0 %v250
    %291 = vmatpush1.msra.mxu0 %v249
    %292 = vmatprep.subr.mxu0 %v248
    %293 = vmatpush1.msra.mxu0 %v247
    %294 = vmatprep.subr.mxu0 %v246
    %295 = vmatpush1.msra.mxu0 %v245
    %296 = vmatprep.subr.mxu0 %v244
    %297 = vmatpush1.msra.mxu0 %v243
    %298 = vmatprep.subr.mxu0 0.0
    %299 = vmatpush2.msra.mxu0 0.0
    %300 = vmatprep.subr.mxu0 0.0
    %301 = vmatpush2.msra.mxu0 0.0
    %302 = vmatprep.subr.mxu0 0.0
    %303 = vmatpush2.msra.mxu0 0.0
    %304 = vmatprep.subr.mxu0 0.0
    %305 = vmatpush2.msra.mxu0 0.0
    %306 = vmatprep.subr.mxu0 0.0
    %307 = vmatpush2.msra.mxu0 0.0
    %308 = vmatprep.subr.mxu0 0.0
    %309 = vmatpush2.msra.mxu0 0.0
    %310 = vmatprep.subr.mxu0 0.0
    %311 = vmatpush2.msra.mxu0 0.0
    %312 = vmatprep.subr.mxu0 0.0
    %313 = vmatpush2.msra.mxu0 0.0
    %314 = vmatprep.subr.mxu0 0.0
    %315 = vmatpush2.msra.mxu0 0.0
    %316 = vmatprep.subr.mxu0 0.0
    %317 = vmatpush2.msra.mxu0 0.0
    %318 = vmatprep.subr.mxu0 0.0
    %319 = vmatpush2.msra.mxu0 0.0
    %320 = vmatprep.subr.mxu0 0.0
    %321 = vmatpush2.msra.mxu0 0.0
    %322 = vmatprep.subr.mxu0 0.0
    %323 = vmatpush2.msra.mxu0 0.0
    %324 = vmatprep.subr.mxu0 0.0
    %325 = vmatpush2.msra.mxu0 0.0
    %326 = vmatprep.subr.mxu0 0.0
    %327 = vmatpush2.msra.mxu0 0.0
    %328 = vmatprep.subr.mxu0 0.0
    %329 = vmatpush2.msra.mxu0 0.0
    %330 = vmatprep.mubr.f32.mxu0 0.0
    %331 = vmatmul.mubr.f32.gmra.mxu0 %v264
    %v332 = vpop.f32.mrf.mxu0
    %v333 = vadd.f32 0.0, %v332
    %v334 = vpop.f32.mrf.mxu0
    %v335 = vadd.f32 0.0, %v334
    %336 = vdwg.mxu0
    %v337 = vadd.f32 %v260, %v333
    %v338 = vxor.u32 %v337, 2147483648
    %v339 = vmul.f32 %v338, 1.442695
    %v340 = vpow.pop %v339
    %v341 = vadd.f32 %v340, 1.0
    %v342 = vrcp.pop %v341
    %v343 = vmul.f32 1.0, %v342
    %v345 = vlaneseq
    %v346 = vshrl.u32 %v345, 7
    %v347 = vsub.s32 0, %v346
    %v348 = vrot.slane %v259, %v347
    %v350 = vadd.f32 %v335, %v348
    %v351 = vmul.f32 %v343, %v350
    %v353 = vrot.slane %v260, 2
    %v355 = vadd.f32 %v353, %v351
    %v356 = vtanh.pop %v355
    %v357 = vsub.f32 %v261, %v356
    %v360 = vunpack.c.l.s4 1983009808
    %v361 = vunpack.c.0.s8 %v360
    %v362 = vlaneseq
    %v363 = vshrl.u32 %v362, 7
    %v364 = vsub.s32 %v361, %v363
    %v365 = vrot.slane %v357, %v364
    %366 = vrot.lane.b32.xlu0 %v365, 64
    %v367 = vpop.permute.xlu0 %366
    %v369 = vmul.f32 %v343, %v367
    %371 = vrot.lane.b32.xlu0 %v369, 64
    %v372 = vpop.permute.xlu0 %371
    %v374 = vadd.f32 %v356, %v372
    %375 = vst.msk [vmem:[#allocation3] sm:$0x3] %vm241, %v374
    %vm376 = vcmask 254977
    %377 = vst.msk [vmem:[#allocation4 - $0x1] sm:$0x2] %vm376, %v374
    %v379 = vlaneseq
    %v380 = vshrl.u32 %v379, 7
    %v381 = vsub.s32 1, %v380
    %v382 = vrot.slane %v374, %v381
    %383 = vrot.lane.b32.xlu0 %v382, 96
    %v384 = vpop.permute.xlu0 %383
    %386 = vst.msk [vmem:[#allocation5 + $0x6] sm:$0x2] %vm376, %v384
    %s387 = scalar_lea.vmem [#allocation2], 4
    %v388 = vld [vmem:[%s387] sm:$0xf]
    %v389 = vld [vmem:[#allocation3] sm:$0x3]
    %v391 = vsel %vm262, %v389, 0
    %393 = vmatprep.subr.mxu0 0.0
    %394 = vmatpush1.msra.mxu0 0.0
    %395 = vmatprep.subr.mxu0 0.0
    %396 = vmatpush1.msra.mxu0 0.0
    %397 = vmatprep.subr.mxu0 0.0
    %398 = vmatpush1.msra.mxu0 0.0
    %399 = vmatprep.subr.mxu0 0.0
    %400 = vmatpush1.msra.mxu0 0.0
    %401 = vmatprep.subr.mxu0 0.0
    %402 = vmatpush1.msra.mxu0 0.0
    %403 = vmatprep.subr.mxu0 0.0
    %404 = vmatpush1.msra.mxu0 0.0
    %405 = vmatprep.subr.mxu0 0.0
    %406 = vmatpush1.msra.mxu0 0.0
    %407 = vmatprep.subr.mxu0 0.0
    %408 = vmatpush1.msra.mxu0 0.0
    %409 = vmatprep.subr.mxu0 %v258
    %410 = vmatpush1.msra.mxu0 %v257
    %411 = vmatprep.subr.mxu0 %v256
    %412 = vmatpush1.msra.mxu0 %v255
    %413 = vmatprep.subr.mxu0 %v254
    %414 = vmatpush1.msra.mxu0 %v253
    %415 = vmatprep.subr.mxu0 %v252
    %416 = vmatpush1.msra.mxu0 %v251
    %417 = vmatprep.subr.mxu0 %v250
    %418 = vmatpush1.msra.mxu0 %v249
    %419 = vmatprep.subr.mxu0 %v248
    %420 = vmatpush1.msra.mxu0 %v247
    %421 = vmatprep.subr.mxu0 %v246
    %422 = vmatpush1.msra.mxu0 %v245
    %423 = vmatprep.subr.mxu0 %v244
    %424 = vmatpush1.msra.mxu0 %v243
    %425 = vmatprep.subr.mxu0 0.0
    %426 = vmatpush2.msra.mxu0 0.0
    %427 = vmatprep.subr.mxu0 0.0
    %428 = vmatpush2.msra.mxu0 0.0
    %429 = vmatprep.subr.mxu0 0.0
    %430 = vmatpush2.msra.mxu0 0.0
    %431 = vmatprep.subr.mxu0 0.0
    %432 = vmatpush2.msra.mxu0 0.0
    %433 = vmatprep.subr.mxu0 0.0
    %434 = vmatpush2.msra.mxu0 0.0
    %435 = vmatprep.subr.mxu0 0.0
    %436 = vmatpush2.msra.mxu0 0.0
    %437 = vmatprep.subr.mxu0 0.0
    %438 = vmatpush2.msra.mxu0 0.0
    %439 = vmatprep.subr.mxu0 0.0
    %440 = vmatpush2.msra.mxu0 0.0
    %441 = vmatprep.subr.mxu0 0.0
    %442 = vmatpush2.msra.mxu0 0.0
    %443 = vmatprep.subr.mxu0 0.0
    %444 = vmatpush2.msra.mxu0 0.0
    %445 = vmatprep.subr.mxu0 0.0
    %446 = vmatpush2.msra.mxu0 0.0
    %447 = vmatprep.subr.mxu0 0.0
    %448 = vmatpush2.msra.mxu0 0.0
    %449 = vmatprep.subr.mxu0 0.0
    %450 = vmatpush2.msra.mxu0 0.0
    %451 = vmatprep.subr.mxu0 0.0
    %452 = vmatpush2.msra.mxu0 0.0
    %453 = vmatprep.subr.mxu0 0.0
    %454 = vmatpush2.msra.mxu0 0.0
    %455 = vmatprep.subr.mxu0 0.0
    %456 = vmatpush2.msra.mxu0 0.0
    %457 = vmatprep.mubr.f32.mxu0 0.0
    %458 = vmatmul.mubr.f32.gmra.mxu0 %v391
    %v459 = vpop.f32.mrf.mxu0
    %v460 = vadd.f32 0.0, %v459
    %v461 = vpop.f32.mrf.mxu0
    %v462 = vadd.f32 0.0, %v461
    %463 = vdwg.mxu0
    %v464 = vadd.f32 %v388, %v460
    %v465 = vxor.u32 %v464, 2147483648
    %v466 = vmul.f32 %v465, 1.442695
    %v467 = vpow.pop %v466
    %v468 = vadd.f32 %v467, 1.0
    %v469 = vrcp.pop %v468
    %v470 = vmul.f32 1.0, %v469
    %v471 = vadd.f32 %v462, %v348
    %v472 = vmul.f32 %v470, %v471
    %v474 = vrot.slane %v388, 2
    %v476 = vadd.f32 %v474, %v472
    %v477 = vtanh.pop %v476
    %v478 = vsub.f32 %v389, %v477
    %v481 = vunpack.c.l.s4 1983009808
    %v482 = vunpack.c.0.s8 %v481
    %v483 = vlaneseq
    %v484 = vshrl.u32 %v483, 7
    %v485 = vsub.s32 %v482, %v484
    %v486 = vrot.slane %v478, %v485
    %487 = vrot.lane.b32.xlu0 %v486, 64
    %v488 = vpop.permute.xlu0 %487
    %v490 = vmul.f32 %v470, %v488
    %492 = vrot.lane.b32.xlu0 %v490, 64
    %v493 = vpop.permute.xlu0 %492
    %v495 = vadd.f32 %v477, %v493
    %496 = vst.msk [vmem:[#allocation3] sm:$0x3] %vm241, %v495
    %497 = vst.msk [vmem:[#allocation4] sm:$0x2] %vm376, %v495
    %v499 = vlaneseq
    %v500 = vshrl.u32 %v499, 7
    %v501 = vsub.s32 1, %v500
    %v502 = vrot.slane %v495, %v501
    %503 = vrot.lane.b32.xlu0 %v502, 96
    %v504 = vpop.permute.xlu0 %503
    %506 = vst.msk [vmem:[#allocation5 + $0x5] sm:$0x2] %vm376, %v504
    %s507 = scalar_lea.vmem [#allocation2], 8
    %v508 = vld [vmem:[%s507] sm:$0xf]
    %v509 = vld [vmem:[#allocation3] sm:$0x3]
    %v511 = vsel %vm262, %v509, 0
    %513 = vmatprep.subr.mxu0 0.0
    %514 = vmatpush1.msra.mxu0 0.0
    %515 = vmatprep.subr.mxu0 0.0
    %516 = vmatpush1.msra.mxu0 0.0
    %517 = vmatprep.subr.mxu0 0.0
    %518 = vmatpush1.msra.mxu0 0.0
    %519 = vmatprep.subr.mxu0 0.0
    %520 = vmatpush1.msra.mxu0 0.0
    %521 = vmatprep.subr.mxu0 0.0
    %522 = vmatpush1.msra.mxu0 0.0
    %523 = vmatprep.subr.mxu0 0.0
    %524 = vmatpush1.msra.mxu0 0.0
    %525 = vmatprep.subr.mxu0 0.0
    %526 = vmatpush1.msra.mxu0 0.0
    %527 = vmatprep.subr.mxu0 0.0
    %528 = vmatpush1.msra.mxu0 0.0
    %529 = vmatprep.subr.mxu0 %v258
    %530 = vmatpush1.msra.mxu0 %v257
    %531 = vmatprep.subr.mxu0 %v256
    %532 = vmatpush1.msra.mxu0 %v255
    %533 = vmatprep.subr.mxu0 %v254
    %534 = vmatpush1.msra.mxu0 %v253
    %535 = vmatprep.subr.mxu0 %v252
    %536 = vmatpush1.msra.mxu0 %v251
    %537 = vmatprep.subr.mxu0 %v250
    %538 = vmatpush1.msra.mxu0 %v249
    %539 = vmatprep.subr.mxu0 %v248
    %540 = vmatpush1.msra.mxu0 %v247
    %541 = vmatprep.subr.mxu0 %v246
    %542 = vmatpush1.msra.mxu0 %v245
    %543 = vmatprep.subr.mxu0 %v244
    %544 = vmatpush1.msra.mxu0 %v243
    %545 = vmatprep.subr.mxu0 0.0
    %546 = vmatpush2.msra.mxu0 0.0
    %547 = vmatprep.subr.mxu0 0.0
    %548 = vmatpush2.msra.mxu0 0.0
    %549 = vmatprep.subr.mxu0 0.0
    %550 = vmatpush2.msra.mxu0 0.0
    %551 = vmatprep.subr.mxu0 0.0
    %552 = vmatpush2.msra.mxu0 0.0
    %553 = vmatprep.subr.mxu0 0.0
    %554 = vmatpush2.msra.mxu0 0.0
    %555 = vmatprep.subr.mxu0 0.0
    %556 = vmatpush2.msra.mxu0 0.0
    %557 = vmatprep.subr.mxu0 0.0
    %558 = vmatpush2.msra.mxu0 0.0
    %559 = vmatprep.subr.mxu0 0.0
    %560 = vmatpush2.msra.mxu0 0.0
    %561 = vmatprep.subr.mxu0 0.0
    %562 = vmatpush2.msra.mxu0 0.0
    %563 = vmatprep.subr.mxu0 0.0
    %564 = vmatpush2.msra.mxu0 0.0
    %565 = vmatprep.subr.mxu0 0.0
    %566 = vmatpush2.msra.mxu0 0.0
    %567 = vmatprep.subr.mxu0 0.0
    %568 = vmatpush2.msra.mxu0 0.0
    %569 = vmatprep.subr.mxu0 0.0
    %570 = vmatpush2.msra.mxu0 0.0
    %571 = vmatprep.subr.mxu0 0.0
    %572 = vmatpush2.msra.mxu0 0.0
    %573 = vmatprep.subr.mxu0 0.0
    %574 = vmatpush2.msra.mxu0 0.0
    %575 = vmatprep.subr.mxu0 0.0
    %576 = vmatpush2.msra.mxu0 0.0
    %577 = vmatprep.mubr.f32.mxu0 0.0
    %578 = vmatmul.mubr.f32.gmra.mxu0 %v511
    %v579 = vpop.f32.mrf.mxu0
    %v580 = vadd.f32 0.0, %v579
    %v581 = vpop.f32.mrf.mxu0
    %v582 = vadd.f32 0.0, %v581
    %583 = vdwg.mxu0
    %v584 = vadd.f32 %v508, %v580
    %v585 = vxor.u32 %v584, 2147483648
    %v586 = vmul.f32 %v585, 1.442695
    %v587 = vpow.pop %v586
    %v588 = vadd.f32 %v587, 1.0
    %v589 = vrcp.pop %v588
    %v590 = vmul.f32 1.0, %v589
    %v591 = vadd.f32 %v582, %v348
    %v592 = vmul.f32 %v590, %v591
    %v594 = vrot.slane %v508, 2
    %v596 = vadd.f32 %v594, %v592
    %v597 = vtanh.pop %v596
    %v598 = vsub.f32 %v509, %v597
    %v601 = vunpack.c.l.s4 1983009808
    %v602 = vunpack.c.0.s8 %v601
    %v603 = vlaneseq
    %v604 = vshrl.u32 %v603, 7
    %v605 = vsub.s32 %v602, %v604
    %v606 = vrot.slane %v598, %v605
    %607 = vrot.lane.b32.xlu0 %v606, 64
    %v608 = vpop.permute.xlu0 %607
    %v610 = vmul.f32 %v590, %v608
    %612 = vrot.lane.b32.xlu0 %v610, 64
    %v613 = vpop.permute.xlu0 %612
    %v615 = vadd.f32 %v597, %v613
    %616 = vst.msk [vmem:[#allocation3] sm:$0x3] %vm241, %v615
    %617 = vst.msk [vmem:[#allocation4 + $0x1] sm:$0x2] %vm376, %v615
    %v619 = vlaneseq
    %v620 = vshrl.u32 %v619, 7
    %v621 = vsub.s32 1, %v620
    %v622 = vrot.slane %v615, %v621
    %623 = vrot.lane.b32.xlu0 %v622, 96
    %v624 = vpop.permute.xlu0 %623
    %626 = vst.msk [vmem:[#allocation5 + $0x4] sm:$0x2] %vm376, %v624
    %s627 = scalar_lea.vmem [#allocation2], 12
    %v628 = vld [vmem:[%s627] sm:$0xf]
    %v629 = vld [vmem:[#allocation3] sm:$0x3]
    %v631 = vsel %vm262, %v629, 0
    %633 = vmatprep.subr.mxu0 0.0
    %634 = vmatpush1.msra.mxu0 0.0
    %635 = vmatprep.subr.mxu0 0.0
    %636 = vmatpush1.msra.mxu0 0.0
    %637 = vmatprep.subr.mxu0 0.0
    %638 = vmatpush1.msra.mxu0 0.0
    %639 = vmatprep.subr.mxu0 0.0
    %640 = vmatpush1.msra.mxu0 0.0
    %641 = vmatprep.subr.mxu0 0.0
    %642 = vmatpush1.msra.mxu0 0.0
    %643 = vmatprep.subr.mxu0 0.0
    %644 = vmatpush1.msra.mxu0 0.0
    %645 = vmatprep.subr.mxu0 0.0
    %646 = vmatpush1.msra.mxu0 0.0
    %647 = vmatprep.subr.mxu0 0.0
    %648 = vmatpush1.msra.mxu0 0.0
    %649 = vmatprep.subr.mxu0 %v258
    %650 = vmatpush1.msra.mxu0 %v257
    %651 = vmatprep.subr.mxu0 %v256
    %652 = vmatpush1.msra.mxu0 %v255
    %653 = vmatprep.subr.mxu0 %v254
    %654 = vmatpush1.msra.mxu0 %v253
    %655 = vmatprep.subr.mxu0 %v252
    %656 = vmatpush1.msra.mxu0 %v251
    %657 = vmatprep.subr.mxu0 %v250
    %658 = vmatpush1.msra.mxu0 %v249
    %659 = vmatprep.subr.mxu0 %v248
    %660 = vmatpush1.msra.mxu0 %v247
    %661 = vmatprep.subr.mxu0 %v246
    %662 = vmatpush1.msra.mxu0 %v245
    %663 = vmatprep.subr.mxu0 %v244
    %664 = vmatpush1.msra.mxu0 %v243
    %665 = vmatprep.subr.mxu0 0.0
    %666 = vmatpush2.msra.mxu0 0.0
    %667 = vmatprep.subr.mxu0 0.0
    %668 = vmatpush2.msra.mxu0 0.0
    %669 = vmatprep.subr.mxu0 0.0
    %670 = vmatpush2.msra.mxu0 0.0
    %671 = vmatprep.subr.mxu0 0.0
    %672 = vmatpush2.msra.mxu0 0.0
    %673 = vmatprep.subr.mxu0 0.0
    %674 = vmatpush2.msra.mxu0 0.0
    %675 = vmatprep.subr.mxu0 0.0
    %676 = vmatpush2.msra.mxu0 0.0
    %677 = vmatprep.subr.mxu0 0.0
    %678 = vmatpush2.msra.mxu0 0.0
    %679 = vmatprep.subr.mxu0 0.0
    %680 = vmatpush2.msra.mxu0 0.0
    %681 = vmatprep.subr.mxu0 0.0
    %682 = vmatpush2.msra.mxu0 0.0
    %683 = vmatprep.subr.mxu0 0.0
    %684 = vmatpush2.msra.mxu0 0.0
    %685 = vmatprep.subr.mxu0 0.0
    %686 = vmatpush2.msra.mxu0 0.0
    %687 = vmatprep.subr.mxu0 0.0
    %688 = vmatpush2.msra.mxu0 0.0
    %689 = vmatprep.subr.mxu0 0.0
    %690 = vmatpush2.msra.mxu0 0.0
    %691 = vmatprep.subr.mxu0 0.0
    %692 = vmatpush2.msra.mxu0 0.0
    %693 = vmatprep.subr.mxu0 0.0
    %694 = vmatpush2.msra.mxu0 0.0
    %695 = vmatprep.subr.mxu0 0.0
    %696 = vmatpush2.msra.mxu0 0.0
    %697 = vmatprep.mubr.f32.mxu0 0.0
    %698 = vmatmul.mubr.f32.gmra.mxu0 %v631
    %v699 = vpop.f32.mrf.mxu0
    %v700 = vadd.f32 0.0, %v699
    %v701 = vpop.f32.mrf.mxu0
    %v702 = vadd.f32 0.0, %v701
    %703 = vdwg.mxu0
    %v704 = vadd.f32 %v628, %v700
    %v705 = vxor.u32 %v704, 2147483648
    %v706 = vmul.f32 %v705, 1.442695
    %v707 = vpow.pop %v706
    %v708 = vadd.f32 %v707, 1.0
    %v709 = vrcp.pop %v708
    %v710 = vmul.f32 1.0, %v709
    %v711 = vadd.f32 %v702, %v348
    %v712 = vmul.f32 %v710, %v711
    %v714 = vrot.slane %v628, 2
    %v716 = vadd.f32 %v714, %v712
    %v717 = vtanh.pop %v716
    %v718 = vsub.f32 %v629, %v717
    %v721 = vunpack.c.l.s4 1983009808
    %v722 = vunpack.c.0.s8 %v721
    %v723 = vlaneseq
    %v724 = vshrl.u32 %v723, 7
    %v725 = vsub.s32 %v722, %v724
    %v726 = vrot.slane %v718, %v725
    %727 = vrot.lane.b32.xlu0 %v726, 64
    %v728 = vpop.permute.xlu0 %727
    %v730 = vmul.f32 %v710, %v728
    %732 = vrot.lane.b32.xlu0 %v730, 64
    %v733 = vpop.permute.xlu0 %732
    %v735 = vadd.f32 %v717, %v733
    %736 = vst.msk [vmem:[#allocation3] sm:$0x3] %vm241, %v735
    %737 = vst.msk [vmem:[#allocation4 + $0x2] sm:$0x2] %vm376, %v735
    %v739 = vlaneseq
    %v740 = vshrl.u32 %v739, 7
    %v741 = vsub.s32 1, %v740
    %v742 = vrot.slane %v735, %v741
    %743 = vrot.lane.b32.xlu0 %v742, 96
    %v744 = vpop.permute.xlu0 %743
    %746 = vst.msk [vmem:[#allocation5 + $0x3] sm:$0x2] %vm376, %v744
    %s747 = scalar_lea.vmem [#allocation2], 16
    %v748 = vld [vmem:[%s747] sm:$0xf]
    %v749 = vld [vmem:[#allocation3] sm:$0x3]
    %v751 = vsel %vm262, %v749, 0
    %753 = vmatprep.subr.mxu0 0.0
    %754 = vmatpush1.msra.mxu0 0.0
    %755 = vmatprep.subr.mxu0 0.0
    %756 = vmatpush1.msra.mxu0 0.0
    %757 = vmatprep.subr.mxu0 0.0
    %758 = vmatpush1.msra.mxu0 0.0
    %759 = vmatprep.subr.mxu0 0.0
    %760 = vmatpush1.msra.mxu0 0.0
    %761 = vmatprep.subr.mxu0 0.0
    %762 = vmatpush1.msra.mxu0 0.0
    %763 = vmatprep.subr.mxu0 0.0
    %764 = vmatpush1.msra.mxu0 0.0
    %765 = vmatprep.subr.mxu0 0.0
    %766 = vmatpush1.msra.mxu0 0.0
    %767 = vmatprep.subr.mxu0 0.0
    %768 = vmatpush1.msra.mxu0 0.0
    %769 = vmatprep.subr.mxu0 %v258
    %770 = vmatpush1.msra.mxu0 %v257
    %771 = vmatprep.subr.mxu0 %v256
    %772 = vmatpush1.msra.mxu0 %v255
    %773 = vmatprep.subr.mxu0 %v254
    %774 = vmatpush1.msra.mxu0 %v253
    %775 = vmatprep.subr.mxu0 %v252
    %776 = vmatpush1.msra.mxu0 %v251
    %777 = vmatprep.subr.mxu0 %v250
    %778 = vmatpush1.msra.mxu0 %v249
    %779 = vmatprep.subr.mxu0 %v248
    %780 = vmatpush1.msra.mxu0 %v247
    %781 = vmatprep.subr.mxu0 %v246
    %782 = vmatpush1.msra.mxu0 %v245
    %783 = vmatprep.subr.mxu0 %v244
    %784 = vmatpush1.msra.mxu0 %v243
    %785 = vmatprep.subr.mxu0 0.0
    %786 = vmatpush2.msra.mxu0 0.0
    %787 = vmatprep.subr.mxu0 0.0
    %788 = vmatpush2.msra.mxu0 0.0
    %789 = vmatprep.subr.mxu0 0.0
    %790 = vmatpush2.msra.mxu0 0.0
    %791 = vmatprep.subr.mxu0 0.0
    %792 = vmatpush2.msra.mxu0 0.0
    %793 = vmatprep.subr.mxu0 0.0
    %794 = vmatpush2.msra.mxu0 0.0
    %795 = vmatprep.subr.mxu0 0.0
    %796 = vmatpush2.msra.mxu0 0.0
    %797 = vmatprep.subr.mxu0 0.0
    %798 = vmatpush2.msra.mxu0 0.0
    %799 = vmatprep.subr.mxu0 0.0
    %800 = vmatpush2.msra.mxu0 0.0
    %801 = vmatprep.subr.mxu0 0.0
    %802 = vmatpush2.msra.mxu0 0.0
    %803 = vmatprep.subr.mxu0 0.0
    %804 = vmatpush2.msra.mxu0 0.0
    %805 = vmatprep.subr.mxu0 0.0
    %806 = vmatpush2.msra.mxu0 0.0
    %807 = vmatprep.subr.mxu0 0.0
    %808 = vmatpush2.msra.mxu0 0.0
    %809 = vmatprep.subr.mxu0 0.0
    %810 = vmatpush2.msra.mxu0 0.0
    %811 = vmatprep.subr.mxu0 0.0
    %812 = vmatpush2.msra.mxu0 0.0
    %813 = vmatprep.subr.mxu0 0.0
    %814 = vmatpush2.msra.mxu0 0.0
    %815 = vmatprep.subr.mxu0 0.0
    %816 = vmatpush2.msra.mxu0 0.0
    %817 = vmatprep.mubr.f32.mxu0 0.0
    %818 = vmatmul.mubr.f32.gmra.mxu0 %v751
    %v819 = vpop.f32.mrf.mxu0
    %v820 = vadd.f32 0.0, %v819
    %v821 = vpop.f32.mrf.mxu0
    %v822 = vadd.f32 0.0, %v821
    %823 = vdwg.mxu0
    %v824 = vadd.f32 %v748, %v820
    %v825 = vxor.u32 %v824, 2147483648
    %v826 = vmul.f32 %v825, 1.442695
    %v827 = vpow.pop %v826
    %v828 = vadd.f32 %v827, 1.0
    %v829 = vrcp.pop %v828
    %v830 = vmul.f32 1.0, %v829
    %v831 = vadd.f32 %v822, %v348
    %v832 = vmul.f32 %v830, %v831
    %v834 = vrot.slane %v748, 2
    %v836 = vadd.f32 %v834, %v832
    %v837 = vtanh.pop %v836
    %v838 = vsub.f32 %v749, %v837
    %v841 = vunpack.c.l.s4 1983009808
    %v842 = vunpack.c.0.s8 %v841
    %v843 = vlaneseq
    %v844 = vshrl.u32 %v843, 7
    %v845 = vsub.s32 %v842, %v844
    %v846 = vrot.slane %v838, %v845
    %847 = vrot.lane.b32.xlu0 %v846, 64
    %v848 = vpop.permute.xlu0 %847
    %v850 = vmul.f32 %v830, %v848
    %852 = vrot.lane.b32.xlu0 %v850, 64
    %v853 = vpop.permute.xlu0 %852
    %v855 = vadd.f32 %v837, %v853
    %856 = vst.msk [vmem:[#allocation3] sm:$0x3] %vm241, %v855
    %857 = vst.msk [vmem:[#allocation4 + $0x3] sm:$0x2] %vm376, %v855
    %v859 = vlaneseq
    %v860 = vshrl.u32 %v859, 7
    %v861 = vsub.s32 1, %v860
    %v862 = vrot.slane %v855, %v861
    %863 = vrot.lane.b32.xlu0 %v862, 96
    %v864 = vpop.permute.xlu0 %863
    %866 = vst.msk [vmem:[#allocation5 + $0x2] sm:$0x2] %vm376, %v864
    %s867 = scalar_lea.vmem [#allocation2], 20
    %v868 = vld [vmem:[%s867] sm:$0xf]
    %v869 = vld [vmem:[#allocation3] sm:$0x3]
    %v871 = vsel %vm262, %v869, 0
    %873 = vmatprep.subr.mxu0 0.0
    %874 = vmatpush1.msra.mxu0 0.0
    %875 = vmatprep.subr.mxu0 0.0
    %876 = vmatpush1.msra.mxu0 0.0
    %877 = vmatprep.subr.mxu0 0.0
    %878 = vmatpush1.msra.mxu0 0.0
    %879 = vmatprep.subr.mxu0 0.0
    %880 = vmatpush1.msra.mxu0 0.0
    %881 = vmatprep.subr.mxu0 0.0
    %882 = vmatpush1.msra.mxu0 0.0
    %883 = vmatprep.subr.mxu0 0.0
    %884 = vmatpush1.msra.mxu0 0.0
    %885 = vmatprep.subr.mxu0 0.0
    %886 = vmatpush1.msra.mxu0 0.0
    %887 = vmatprep.subr.mxu0 0.0
    %888 = vmatpush1.msra.mxu0 0.0
    %889 = vmatprep.subr.mxu0 %v258
    %890 = vmatpush1.msra.mxu0 %v257
    %891 = vmatprep.subr.mxu0 %v256
    %892 = vmatpush1.msra.mxu0 %v255
    %893 = vmatprep.subr.mxu0 %v254
    %894 = vmatpush1.msra.mxu0 %v253
    %895 = vmatprep.subr.mxu0 %v252
    %896 = vmatpush1.msra.mxu0 %v251
    %897 = vmatprep.subr.mxu0 %v250
    %898 = vmatpush1.msra.mxu0 %v249
    %899 = vmatprep.subr.mxu0 %v248
    %900 = vmatpush1.msra.mxu0 %v247
    %901 = vmatprep.subr.mxu0 %v246
    %902 = vmatpush1.msra.mxu0 %v245
    %903 = vmatprep.subr.mxu0 %v244
    %904 = vmatpush1.msra.mxu0 %v243
    %905 = vmatprep.subr.mxu0 0.0
    %906 = vmatpush2.msra.mxu0 0.0
    %907 = vmatprep.subr.mxu0 0.0
    %908 = vmatpush2.msra.mxu0 0.0
    %909 = vmatprep.subr.mxu0 0.0
    %910 = vmatpush2.msra.mxu0 0.0
    %911 = vmatprep.subr.mxu0 0.0
    %912 = vmatpush2.msra.mxu0 0.0
    %913 = vmatprep.subr.mxu0 0.0
    %914 = vmatpush2.msra.mxu0 0.0
    %915 = vmatprep.subr.mxu0 0.0
    %916 = vmatpush2.msra.mxu0 0.0
    %917 = vmatprep.subr.mxu0 0.0
    %918 = vmatpush2.msra.mxu0 0.0
    %919 = vmatprep.subr.mxu0 0.0
    %920 = vmatpush2.msra.mxu0 0.0
    %921 = vmatprep.subr.mxu0 0.0
    %922 = vmatpush2.msra.mxu0 0.0
    %923 = vmatprep.subr.mxu0 0.0
    %924 = vmatpush2.msra.mxu0 0.0
    %925 = vmatprep.subr.mxu0 0.0
    %926 = vmatpush2.msra.mxu0 0.0
    %927 = vmatprep.subr.mxu0 0.0
    %928 = vmatpush2.msra.mxu0 0.0
    %929 = vmatprep.subr.mxu0 0.0
    %930 = vmatpush2.msra.mxu0 0.0
    %931 = vmatprep.subr.mxu0 0.0
    %932 = vmatpush2.msra.mxu0 0.0
    %933 = vmatprep.subr.mxu0 0.0
    %934 = vmatpush2.msra.mxu0 0.0
    %935 = vmatprep.subr.mxu0 0.0
    %936 = vmatpush2.msra.mxu0 0.0
    %937 = vmatprep.mubr.f32.mxu0 0.0
    %938 = vmatmul.mubr.f32.gmra.mxu0 %v871
    %v939 = vpop.f32.mrf.mxu0
    %v940 = vadd.f32 0.0, %v939
    %v941 = vpop.f32.mrf.mxu0
    %v942 = vadd.f32 0.0, %v941
    %943 = vdwg.mxu0
    %v944 = vadd.f32 %v868, %v940
    %v945 = vxor.u32 %v944, 2147483648
    %v946 = vmul.f32 %v945, 1.442695
    %v947 = vpow.pop %v946
    %v948 = vadd.f32 %v947, 1.0
    %v949 = vrcp.pop %v948
    %v950 = vmul.f32 1.0, %v949
    %v951 = vadd.f32 %v942, %v348
    %v952 = vmul.f32 %v950, %v951
    %v954 = vrot.slane %v868, 2
    %v956 = vadd.f32 %v954, %v952
    %v957 = vtanh.pop %v956
    %v958 = vsub.f32 %v869, %v957
    %v961 = vunpack.c.l.s4 1983009808
    %v962 = vunpack.c.0.s8 %v961
    %v963 = vlaneseq
    %v964 = vshrl.u32 %v963, 7
    %v965 = vsub.s32 %v962, %v964
    %v966 = vrot.slane %v958, %v965
    %967 = vrot.lane.b32.xlu0 %v966, 64
    %v968 = vpop.permute.xlu0 %967
    %v970 = vmul.f32 %v950, %v968
    %972 = vrot.lane.b32.xlu0 %v970, 64
    %v973 = vpop.permute.xlu0 %972
    %v975 = vadd.f32 %v957, %v973
    %976 = vst.msk [vmem:[#allocation3] sm:$0x3] %vm241, %v975
    %977 = vst.msk [vmem:[#allocation4 + $0x4] sm:$0x2] %vm376, %v975
    %v979 = vlaneseq
    %v980 = vshrl.u32 %v979, 7
    %v981 = vsub.s32 1, %v980
    %v982 = vrot.slane %v975, %v981
    %983 = vrot.lane.b32.xlu0 %v982, 96
    %v984 = vpop.permute.xlu0 %983
    %986 = vst.msk [vmem:[#allocation5 + $0x1] sm:$0x2] %vm376, %v984
    %s987 = scalar_lea.vmem [#allocation2], 24
    %v988 = vld [vmem:[%s987] sm:$0xf]
    %v989 = vld [vmem:[#allocation3] sm:$0x3]
    %v991 = vsel %vm262, %v989, 0
    %993 = vmatprep.subr.mxu0 0.0
    %994 = vmatpush1.msra.mxu0 0.0
    %995 = vmatprep.subr.mxu0 0.0
    %996 = vmatpush1.msra.mxu0 0.0
    %997 = vmatprep.subr.mxu0 0.0
    %998 = vmatpush1.msra.mxu0 0.0
    %999 = vmatprep.subr.mxu0 0.0
    %1000 = vmatpush1.msra.mxu0 0.0
    %1001 = vmatprep.subr.mxu0 0.0
    %1002 = vmatpush1.msra.mxu0 0.0
    %1003 = vmatprep.subr.mxu0 0.0
    %1004 = vmatpush1.msra.mxu0 0.0
    %1005 = vmatprep.subr.mxu0 0.0
    %1006 = vmatpush1.msra.mxu0 0.0
    %1007 = vmatprep.subr.mxu0 0.0
    %1008 = vmatpush1.msra.mxu0 0.0
    %1009 = vmatprep.subr.mxu0 %v258
    %1010 = vmatpush1.msra.mxu0 %v257
    %1011 = vmatprep.subr.mxu0 %v256
    %1012 = vmatpush1.msra.mxu0 %v255
    %1013 = vmatprep.subr.mxu0 %v254
    %1014 = vmatpush1.msra.mxu0 %v253
    %1015 = vmatprep.subr.mxu0 %v252
    %1016 = vmatpush1.msra.mxu0 %v251
    %1017 = vmatprep.subr.mxu0 %v250
    %1018 = vmatpush1.msra.mxu0 %v249
    %1019 = vmatprep.subr.mxu0 %v248
    %1020 = vmatpush1.msra.mxu0 %v247
    %1021 = vmatprep.subr.mxu0 %v246
    %1022 = vmatpush1.msra.mxu0 %v245
    %1023 = vmatprep.subr.mxu0 %v244
    %1024 = vmatpush1.msra.mxu0 %v243
    %1025 = vmatprep.subr.mxu0 0.0
    %1026 = vmatpush2.msra.mxu0 0.0
    %1027 = vmatprep.subr.mxu0 0.0
    %1028 = vmatpush2.msra.mxu0 0.0
    %1029 = vmatprep.subr.mxu0 0.0
    %1030 = vmatpush2.msra.mxu0 0.0
    %1031 = vmatprep.subr.mxu0 0.0
    %1032 = vmatpush2.msra.mxu0 0.0
    %1033 = vmatprep.subr.mxu0 0.0
    %1034 = vmatpush2.msra.mxu0 0.0
    %1035 = vmatprep.subr.mxu0 0.0
    %1036 = vmatpush2.msra.mxu0 0.0
    %1037 = vmatprep.subr.mxu0 0.0
    %1038 = vmatpush2.msra.mxu0 0.0
    %1039 = vmatprep.subr.mxu0 0.0
    %1040 = vmatpush2.msra.mxu0 0.0
    %1041 = vmatprep.subr.mxu0 0.0
    %1042 = vmatpush2.msra.mxu0 0.0
    %1043 = vmatprep.subr.mxu0 0.0
    %1044 = vmatpush2.msra.mxu0 0.0
    %1045 = vmatprep.subr.mxu0 0.0
    %1046 = vmatpush2.msra.mxu0 0.0
    %1047 = vmatprep.subr.mxu0 0.0
    %1048 = vmatpush2.msra.mxu0 0.0
    %1049 = vmatprep.subr.mxu0 0.0
    %1050 = vmatpush2.msra.mxu0 0.0
    %1051 = vmatprep.subr.mxu0 0.0
    %1052 = vmatpush2.msra.mxu0 0.0
    %1053 = vmatprep.subr.mxu0 0.0
    %1054 = vmatpush2.msra.mxu0 0.0
    %1055 = vmatprep.subr.mxu0 0.0
    %1056 = vmatpush2.msra.mxu0 0.0
    %1057 = vmatprep.mubr.f32.mxu0 0.0
    %1058 = vmatmul.mubr.f32.gmra.mxu0 %v991
    %v1059 = vpop.f32.mrf.mxu0
    %v1060 = vadd.f32 0.0, %v1059
    %v1061 = vpop.f32.mrf.mxu0
    %v1062 = vadd.f32 0.0, %v1061
    %1063 = vdwg.mxu0
    %v1064 = vadd.f32 %v988, %v1060
    %v1065 = vxor.u32 %v1064, 2147483648
    %v1066 = vmul.f32 %v1065, 1.442695
    %v1067 = vpow.pop %v1066
    %v1068 = vadd.f32 %v1067, 1.0
    %v1069 = vrcp.pop %v1068
    %v1070 = vmul.f32 1.0, %v1069
    %v1071 = vadd.f32 %v1062, %v348
    %v1072 = vmul.f32 %v1070, %v1071
    %v1074 = vrot.slane %v988, 2
    %v1076 = vadd.f32 %v1074, %v1072
    %v1077 = vtanh.pop %v1076
    %v1078 = vsub.f32 %v989, %v1077
    %v1081 = vunpack.c.l.s4 1983009808
    %v1082 = vunpack.c.0.s8 %v1081
    %v1083 = vlaneseq
    %v1084 = vshrl.u32 %v1083, 7
    %v1085 = vsub.s32 %v1082, %v1084
    %v1086 = vrot.slane %v1078, %v1085
    %1087 = vrot.lane.b32.xlu0 %v1086, 64
    %v1088 = vpop.permute.xlu0 %1087
    %v1090 = vmul.f32 %v1070, %v1088
    %1092 = vrot.lane.b32.xlu0 %v1090, 64
    %v1093 = vpop.permute.xlu0 %1092
    %v1095 = vadd.f32 %v1077, %v1093
    %1096 = vst.msk [vmem:[#allocation3] sm:$0x3] %vm241, %v1095
    %1097 = vst.msk [vmem:[#allocation4 + $0x5] sm:$0x2] %vm376, %v1095
    %v1099 = vlaneseq
    %v1100 = vshrl.u32 %v1099, 7
    %v1101 = vsub.s32 1, %v1100
    %v1102 = vrot.slane %v1095, %v1101
    %1103 = vrot.lane.b32.xlu0 %v1102, 96
    %v1104 = vpop.permute.xlu0 %1103
    %1106 = vst.msk [vmem:[#allocation5] sm:$0x2] %vm376, %v1104
    %s1107 = scalar_lea.vmem [#allocation2], 28
    %v1108 = vld [vmem:[%s1107] sm:$0xf]
    %v1109 = vld [vmem:[#allocation3] sm:$0x3]
    %v1111 = vsel %vm262, %v1109, 0
    %1113 = vmatprep.subr.mxu0 0.0
    %1114 = vmatpush1.msra.mxu0 0.0
    %1115 = vmatprep.subr.mxu0 0.0
    %1116 = vmatpush1.msra.mxu0 0.0
    %1117 = vmatprep.subr.mxu0 0.0
    %1118 = vmatpush1.msra.mxu0 0.0
    %1119 = vmatprep.subr.mxu0 0.0
    %1120 = vmatpush1.msra.mxu0 0.0
    %1121 = vmatprep.subr.mxu0 0.0
    %1122 = vmatpush1.msra.mxu0 0.0
    %1123 = vmatprep.subr.mxu0 0.0
    %1124 = vmatpush1.msra.mxu0 0.0
    %1125 = vmatprep.subr.mxu0 0.0
    %1126 = vmatpush1.msra.mxu0 0.0
    %1127 = vmatprep.subr.mxu0 0.0
    %1128 = vmatpush1.msra.mxu0 0.0
    %1129 = vmatprep.subr.mxu0 %v258
    %1130 = vmatpush1.msra.mxu0 %v257
    %1131 = vmatprep.subr.mxu0 %v256
    %1132 = vmatpush1.msra.mxu0 %v255
    %1133 = vmatprep.subr.mxu0 %v254
    %1134 = vmatpush1.msra.mxu0 %v253
    %1135 = vmatprep.subr.mxu0 %v252
    %1136 = vmatpush1.msra.mxu0 %v251
    %1137 = vmatprep.subr.mxu0 %v250
    %1138 = vmatpush1.msra.mxu0 %v249
    %1139 = vmatprep.subr.mxu0 %v248
    %1140 = vmatpush1.msra.mxu0 %v247
    %1141 = vmatprep.subr.mxu0 %v246
    %1142 = vmatpush1.msra.mxu0 %v245
    %1143 = vmatprep.subr.mxu0 %v244
    %1144 = vmatpush1.msra.mxu0 %v243
    %1145 = vmatprep.subr.mxu0 0.0
    %1146 = vmatpush2.msra.mxu0 0.0
    %1147 = vmatprep.subr.mxu0 0.0
    %1148 = vmatpush2.msra.mxu0 0.0
    %1149 = vmatprep.subr.mxu0 0.0
    %1150 = vmatpush2.msra.mxu0 0.0
    %1151 = vmatprep.subr.mxu0 0.0
    %1152 = vmatpush2.msra.mxu0 0.0
    %1153 = vmatprep.subr.mxu0 0.0
    %1154 = vmatpush2.msra.mxu0 0.0
    %1155 = vmatprep.subr.mxu0 0.0
    %1156 = vmatpush2.msra.mxu0 0.0
    %1157 = vmatprep.subr.mxu0 0.0
    %1158 = vmatpush2.msra.mxu0 0.0
    %1159 = vmatprep.subr.mxu0 0.0
    %1160 = vmatpush2.msra.mxu0 0.0
    %1161 = vmatprep.subr.mxu0 0.0
    %1162 = vmatpush2.msra.mxu0 0.0
    %1163 = vmatprep.subr.mxu0 0.0
    %1164 = vmatpush2.msra.mxu0 0.0
    %1165 = vmatprep.subr.mxu0 0.0
    %1166 = vmatpush2.msra.mxu0 0.0
    %1167 = vmatprep.subr.mxu0 0.0
    %1168 = vmatpush2.msra.mxu0 0.0
    %1169 = vmatprep.subr.mxu0 0.0
    %1170 = vmatpush2.msra.mxu0 0.0
    %1171 = vmatprep.subr.mxu0 0.0
    %1172 = vmatpush2.msra.mxu0 0.0
    %1173 = vmatprep.subr.mxu0 0.0
    %1174 = vmatpush2.msra.mxu0 0.0
    %1175 = vmatprep.subr.mxu0 0.0
    %1176 = vmatpush2.msra.mxu0 0.0
    %1177 = vmatprep.mubr.f32.mxu0 0.0
    %1178 = vmatmul.mubr.f32.gmra.mxu0 %v1111
    %v1179 = vpop.f32.mrf.mxu0
    %v1180 = vadd.f32 0.0, %v1179
    %v1181 = vpop.f32.mrf.mxu0
    %v1182 = vadd.f32 0.0, %v1181
    %1183 = vdwg.mxu0
    %v1184 = vadd.f32 %v1108, %v1180
    %v1185 = vxor.u32 %v1184, 2147483648
    %v1186 = vmul.f32 %v1185, 1.442695
    %v1187 = vpow.pop %v1186
    %v1188 = vadd.f32 %v1187, 1.0
    %v1189 = vrcp.pop %v1188
    %v1190 = vmul.f32 1.0, %v1189
    %v1191 = vadd.f32 %v1182, %v348
    %v1192 = vmul.f32 %v1190, %v1191
    %v1194 = vrot.slane %v1108, 2
    %v1196 = vadd.f32 %v1194, %v1192
    %v1197 = vtanh.pop %v1196
    %v1198 = vsub.f32 %v1109, %v1197
    %v1201 = vunpack.c.l.s4 1983009808
    %v1202 = vunpack.c.0.s8 %v1201
    %v1203 = vlaneseq
    %v1204 = vshrl.u32 %v1203, 7
    %v1205 = vsub.s32 %v1202, %v1204
    %v1206 = vrot.slane %v1198, %v1205
    %1207 = vrot.lane.b32.xlu0 %v1206, 64
    %v1208 = vpop.permute.xlu0 %1207
    %v1210 = vmul.f32 %v1190, %v1208
    %1212 = vrot.lane.b32.xlu0 %v1210, 64
    %v1213 = vpop.permute.xlu0 %1212
    %v1215 = vadd.f32 %v1197, %v1213
    %1216 = vst.msk [vmem:[#allocation3] sm:$0x3] %vm241, %v1215
    %1217 = vst.msk [vmem:[#allocation4 + $0x6] sm:$0x2] %vm376, %v1215
    %v1219 = vlaneseq
    %v1220 = vshrl.u32 %v1219, 7
    %v1221 = vsub.s32 1, %v1220
    %v1222 = vrot.slane %v1215, %v1221
    %1223 = vrot.lane.b32.xlu0 %v1222, 96
    %v1224 = vpop.permute.xlu0 %1223
    %1226 = vst.msk [vmem:[#allocation5 - $0x1] sm:$0x2] %vm376, %v1224
    %v1227 = vld [vmem:[#allocation3] sm:$0x3]
    %vm1228 = vcmask 254976
    %1229 = vst.msk [vmem:[#allocation8] sm:$0x3] %vm1228, %v1227
    %v1230 = vld [vmem:[#allocation3] sm:$0x3]
    %1232 = vrot.lane.b32.xlu0 %v1230, 96
    %v1233 = vpop.permute.xlu0 %1232
    %s1235 = scalar_lea.vmem [#allocation8], 2
    %1236 = vst.msk [vmem:[%s1235] sm:$0x3] %vm1228, %v1233
    %v1237 = vld [vmem:[#allocation4] sm:$0xff]
    %v1238 = vld [vmem:[#allocation5] sm:$0xff]
    %1240 = vrot.lane.b32.xlu0 %v1238, 32
    %v1241 = vpop.permute.xlu0 %1240
    %v1243 = vsel %vm100, %v1237, %v1241
    %v1244 = vmax.f32 %v1243, 0.0
    %v1245 = vld [vmem:[%s5] sm:$0xff]
    %v1246 = vld [vmem:[%s5 + $0x8] sm:$0xff]
    %v1247 = vld [vmem:[%s5 + $0x10] sm:$0xff]
    %v1248 = vld [vmem:[%s5 + $0x18] sm:$0xff]
    %v1249 = vld [vmem:[%s5 + $0x20] sm:$0xff]
    %v1250 = vld [vmem:[%s5 + $0x28] sm:$0xff]
    %v1251 = vld [vmem:[%s5 + $0x30] sm:$0xff]
    %v1252 = vld [vmem:[%s5 + $0x38] sm:$0xff]
    %v1253 = vld [vmem:[%s6] sm:$0x1]
    %v1255 = vlaneseq
    %v1256 = vshrl.u32 %v1255, 7
    %v1257 = vsub.s32 0, %v1256
    %v1258 = vrot.slane %v1253, %v1257
    %v1261 = vsel %vm262, %v1244, 0
    %1263 = vmatprep.subr.mxu0 0.0
    %1264 = vmatpush1.msra.mxu0 0.0
    %1265 = vmatprep.subr.mxu0 0.0
    %1266 = vmatpush1.msra.mxu0 0.0
    %1267 = vmatprep.subr.mxu0 0.0
    %1268 = vmatpush1.msra.mxu0 0.0
    %1269 = vmatprep.subr.mxu0 0.0
    %1270 = vmatpush1.msra.mxu0 0.0
    %1271 = vmatprep.subr.mxu0 0.0
    %1272 = vmatpush1.msra.mxu0 0.0
    %1273 = vmatprep.subr.mxu0 0.0
    %1274 = vmatpush1.msra.mxu0 0.0
    %1275 = vmatprep.subr.mxu0 0.0
    %1276 = vmatpush1.msra.mxu0 0.0
    %1277 = vmatprep.subr.mxu0 0.0
    %1278 = vmatpush1.msra.mxu0 0.0
    %1279 = vmatprep.subr.mxu0 0.0
    %1280 = vmatpush1.msra.mxu0 %v1252
    %1281 = vmatprep.subr.mxu0 0.0
    %1282 = vmatpush1.msra.mxu0 %v1251
    %1283 = vmatprep.subr.mxu0 0.0
    %1284 = vmatpush1.msra.mxu0 %v1250
    %1285 = vmatprep.subr.mxu0 0.0
    %1286 = vmatpush1.msra.mxu0 %v1249
    %1287 = vmatprep.subr.mxu0 0.0
    %1288 = vmatpush1.msra.mxu0 %v1248
    %1289 = vmatprep.subr.mxu0 0.0
    %1290 = vmatpush1.msra.mxu0 %v1247
    %1291 = vmatprep.subr.mxu0 0.0
    %1292 = vmatpush1.msra.mxu0 %v1246
    %1293 = vmatprep.subr.mxu0 0.0
    %1294 = vmatpush1.msra.mxu0 %v1245
    %1295 = vmatprep.subr.mxu0 0.0
    %1296 = vmatpush2.msra.mxu0 0.0
    %1297 = vmatprep.subr.mxu0 0.0
    %1298 = vmatpush2.msra.mxu0 0.0
    %1299 = vmatprep.subr.mxu0 0.0
    %1300 = vmatpush2.msra.mxu0 0.0
    %1301 = vmatprep.subr.mxu0 0.0
    %1302 = vmatpush2.msra.mxu0 0.0
    %1303 = vmatprep.subr.mxu0 0.0
    %1304 = vmatpush2.msra.mxu0 0.0
    %1305 = vmatprep.subr.mxu0 0.0
    %1306 = vmatpush2.msra.mxu0 0.0
    %1307 = vmatprep.subr.mxu0 0.0
    %1308 = vmatpush2.msra.mxu0 0.0
    %1309 = vmatprep.subr.mxu0 0.0
    %1310 = vmatpush2.msra.mxu0 0.0
    %1311 = vmatprep.subr.mxu0 0.0
    %1312 = vmatpush2.msra.mxu0 0.0
    %1313 = vmatprep.subr.mxu0 0.0
    %1314 = vmatpush2.msra.mxu0 0.0
    %1315 = vmatprep.subr.mxu0 0.0
    %1316 = vmatpush2.msra.mxu0 0.0
    %1317 = vmatprep.subr.mxu0 0.0
    %1318 = vmatpush2.msra.mxu0 0.0
    %1319 = vmatprep.subr.mxu0 0.0
    %1320 = vmatpush2.msra.mxu0 0.0
    %1321 = vmatprep.subr.mxu0 0.0
    %1322 = vmatpush2.msra.mxu0 0.0
    %1323 = vmatprep.subr.mxu0 0.0
    %1324 = vmatpush2.msra.mxu0 0.0
    %1325 = vmatprep.subr.mxu0 0.0
    %1326 = vmatpush2.msra.mxu0 0.0
    %1327 = vmatprep.mubr.f32.mxu0 0.0
    %1328 = vmatmul.mubr.f32.gmra.mxu0 %v1261
    %v1329 = vpop.f32.mrf.mxu0
    %v1330 = vadd.f32 %v1258, %v1329
    %v1331 = vpop.f32.mrf.mxu0
    %1332 = vdwg.mxu0
    %vm1333 = vcmask 80896
    %v1334 = vsel %vm1333, %v1330, -inf
    %1335 = vmax.xlane.f32.xlu0 %v1334
    %v1336 = vpop.xlane.xlu0 %1335
    %v1337 = vsub.f32 %v1330, %v1336
    %v1338 = vmul.f32 %v1337, 1.442695
    %v1339 = vpow.pop %v1338
    %v1340 = vsel %vm1333, %v1339, 0.0
    %1341 = vadd.xlane.f32.xlu0 %v1340
    %v1342 = vpop.xlane.xlu0 %1341
    %v1343 = vlog2.pop %v1342
    %v1344 = vmul.f32 %v1343, 0.6931472
    %v1345 = vsub.f32 %v1337, %v1344
    %1346 = vst.msk [vmem:[#allocation6] sm:$0xff] %vm1333, %v1345
    // Predicated region
    $region30: #{bi_gru_forward.1} parent=1 // pred_check
      _
    $region31: #{bi_gru_forward.1} parent=1 // pred_check_branch
      %1348 = sbr.rel (0) target = $region33
    $region32: #{bi_gru_forward.1} parent=1 // pred_region
      %s1350 = ssub.s32 128, 128
      %1351 = vsyncadd [#allocation7], %s1350
      %s1353 = sshll.u32 [#allocation6], 4
      %s1354 = int_to_ptr.vmem [resolvable:$true] %s1353
      %1356 = dma.vmem_to_hbm [thread:$0]  %s1354, 128, %s7, [#allocation7]
    $region33: #{bi_gru_forward.1} parent=1 // pred_fallthru
      _
    // Predicated region
    $region34: #{bi_gru_forward.1} parent=1 // pred_check
      _
    $region35: #{bi_gru_forward.1} parent=1 // pred_check_branch
      %1358 = sbr.rel (0) target = $region37
    $region36: #{bi_gru_forward.1} parent=1 // pred_region
      %s1360 = ssub.s32 64, 64
      %1361 = vsyncadd [#allocation9], %s1360
      %s1362 = sshll.u32 [#allocation8], 4
      %s1363 = int_to_ptr.vmem [resolvable:$true] %s1362
      %1368 = dma.vmem_to_hbm [thread:$0]  %s1363, 64, %s8, [#allocation9], 32, 32, 2
    $region37: #{bi_gru_forward.1} parent=1 // pred_fallthru
      _
    // Predicated region
    $region38: #{bi_gru_forward.1} parent=1 // pred_check
      _
    $region39: #{bi_gru_forward.1} parent=1 // pred_check_branch
      %1370 = sbr.rel (0) target = $region41
    $region40: #{bi_gru_forward.1} parent=1 // pred_region
      %1371 = dma.done [#allocation7], 128
    $region41: #{bi_gru_forward.1} parent=1 // pred_fallthru
      _
    // Predicated region
    $region42: #{bi_gru_forward.1} parent=1 // pred_check
      _
    $region43: #{bi_gru_forward.1} parent=1 // pred_check_branch
      %1373 = sbr.rel (0) target = $region45
    $region44: #{bi_gru_forward.1} parent=1 // pred_region
      %1374 = dma.done [#allocation9], 64
    $region45: #{bi_gru_forward.1} parent=1 // pred_fallthru
      _
    %1375 = vsyncpa [#allocation7], 1
    %1376 = vsyncpa [#allocation9], 1

</llo_original>
